<compile_context>
chip_gen: v6e
topology: v6e:2x2x1
jax: 0.10.0
libtpu: 0.0.40
codegen_flags: <defaults>
</compile_context>

<pallas_src>
import jax
import jax.numpy as jnp
from jax.experimental import pallas as pl
from jax.experimental.pallas import tpu as pltpu

IN_F = 784
HID_F = 512
OUT_F = 10
OUT_F_PAD = 128   # lane-dense output width (unmasked vst)


def _mlp_kernel(x_ref, w1_ref, b1_ref, w2_ref, b2_ref, o_ref):
    # first_layer: Linear(784->512). bf16 operands, f32 accumulation on MXU.
    x = x_ref[...].astype(jnp.bfloat16)
    h = jnp.dot(x, w1_ref[...], preferred_element_type=jnp.float32)
    h = jnp.maximum(h + b1_ref[...], 0.0)          # +bias (1,512) broadcast, ReLU
    # Dropout(p=0.2): eval-mode identity (no scaling at inference).
    # TODO(synk): training-mode dropout would need pltpu.prng_seed /
    # prng_random_bits plus 1/(1-p) scaling.
    # final_layer: Linear(512->10), output columns zero-padded to 128 lanes.
    out = jnp.dot(h.astype(jnp.bfloat16), w2_ref[...],
                  preferred_element_type=jnp.float32)
    o_ref[...] = (out + b2_ref[...]).astype(o_ref.dtype)


def prepare_params(w1, b1, w2, b2):
    """Cast weights to bf16 once (halves resident/streamed weight bytes).

    w1: (784,512) -> bf16 unchanged shape (no K padding).
    w2: (512,10)  -> (512,128) bf16, zero-padded output columns.
    b1: (1,512) f32; b2: (1,10) -> (1,128) f32, zero-padded.
    """
    w1p = w1.astype(jnp.bfloat16)
    w2p = jnp.zeros((HID_F, OUT_F_PAD), jnp.bfloat16).at[:, :OUT_F].set(
        w2.astype(jnp.bfloat16))
    b2p = jnp.zeros((1, OUT_F_PAD), jnp.float32).at[:, :OUT_F].set(
        b2.astype(jnp.float32))
    return w1p, b1.astype(jnp.float32), w2p, b2p


def _choose_tile(B, max_tb, min_tiles):
    """Batch tile: multiple of 16 (bf16 sublane packing), <= max_tb, and at
    least `min_tiles` tiles when B is big enough (v7x megacore sharding).
    Worst-case padded-row waste is <= 15 rows."""
    max_tb = max(16, (max_tb // 16) * 16)          # defensive 16-alignment
    n_tiles = max(pl.cdiv(B, max_tb), min(min_tiles, pl.cdiv(B, 16)))
    return min(max_tb, 16 * pl.cdiv(pl.cdiv(B, n_tiles), 16))


def digit_classifier_forward(x, w1p, b1, w2p, b2p, *, max_tb=1024, min_tiles=2):
    """x: (B, 784) f32 or bf16, fed to the kernel unpadded/uncast.
    Returns (B, 10) f32 logits. Expects params from prepare_params()."""
    B = x.shape[0]
    TB = _choose_tile(B, max_tb, min_tiles)
    n_tiles = pl.cdiv(B, TB)
    B_alloc = n_tiles * TB                         # output rows: writes never overhang

    out = pl.pallas_call(
        _mlp_kernel,
        out_shape=jax.ShapeDtypeStruct((B_alloc, OUT_F_PAD), jnp.bfloat16),
        grid_spec=pltpu.PrefetchScalarGridSpec(
            num_scalar_prefetch=0,
            grid=(n_tiles,),
            in_specs=[
                # x tiles stream along the batch axis (double-buffered).
                # Last dim 784 == full array extent (legal though not a
                # 128-multiple); any final-tile row overhang is clamped by the
                # boundary DMA and never reaches valid output rows.
                pl.BlockSpec((TB, IN_F), lambda i: (i, 0)),
                # Weights / biases: same block every step -> resident in VMEM.
                pl.BlockSpec((IN_F, HID_F), lambda i: (0, 0)),
                pl.BlockSpec((1, HID_F), lambda i: (0, 0)),
                pl.BlockSpec((HID_F, OUT_F_PAD), lambda i: (0, 0)),
                pl.BlockSpec((1, OUT_F_PAD), lambda i: (0, 0)),
            ],
            out_specs=pl.BlockSpec((TB, OUT_F_PAD), lambda i: (i, 0)),
        ),
        compiler_params=pltpu.CompilerParams(
            # Independent batch tiles -> shard across v7x's two TensorCores.
            dimension_semantics=("parallel",),
            # Headroom for TB=1024 tiles even on v5e's 16 MiB scoped default,
            # still well inside v7x's 64 MiB physical VMEM.
            vmem_limit_bytes=48 * 1024 * 1024,
        ),
    )(x, w1p, b1, w2p, b2p)

    return out[:B, :OUT_F].astype(jnp.float32)


def init_params(key):
    """Deterministic init matching nn.Linear default (uniform(+-1/sqrt(fan_in)))."""
    k1, k2, k3, k4 = jax.random.split(key, 4)
    lim1 = 1.0 / jnp.sqrt(jnp.float32(IN_F))
    lim2 = 1.0 / jnp.sqrt(jnp.float32(HID_F))
    w1 = jax.random.uniform(k1, (IN_F, HID_F), jnp.float32, -lim1, lim1)
    b1 = jax.random.uniform(k2, (1, HID_F), jnp.float32, -lim1, lim1)
    w2 = jax.random.uniform(k3, (HID_F, OUT_F), jnp.float32, -lim2, lim2)
    b2 = jax.random.uniform(k4, (1, OUT_F), jnp.float32, -lim2, lim2)
    return w1, b1, w2, b2


if __name__ == "__main__":
    key = jax.random.PRNGKey(0)
    kx, kp = jax.random.split(key)
    B = 32   # small demo batch; yields a 2-tile grid (exercises the parallel axis)
    x = jax.random.normal(kx, (B, IN_F), jnp.float32)
    w1, b1, w2, b2 = init_params(kp)
    w1p, b1p, w2p, b2p = prepare_params(w1, b1, w2, b2)

    out = digit_classifier_forward(x, w1p, b1p, w2p, b2p)
    out = jax.block_until_ready(out)
    assert out.shape == (B, OUT_F)
    assert out.dtype == jnp.float32

    # Reference 1: same bf16 compute path (incl. bf16 logit store) in plain JAX.
    xb = x.astype(jnp.bfloat16)
    h_ref = jnp.maximum(
        jnp.dot(xb, w1.astype(jnp.bfloat16),
                preferred_element_type=jnp.float32) + b1, 0.0)
    ref_bf16 = (jnp.dot(h_ref.astype(jnp.bfloat16), w2.astype(jnp.bfloat16),
                        preferred_element_type=jnp.float32)
                + b2).astype(jnp.bfloat16).astype(jnp.float32)
    assert jnp.allclose(out, ref_bf16, atol=1e-2, rtol=1e-2)

    # Reference 2: full f32 math (loose tolerance: bf16 quantization error).
    ref_f32 = jnp.maximum(x @ w1 + b1, 0.0) @ w2 + b2
    assert jnp.allclose(out, ref_f32, atol=7e-2, rtol=7e-2)

    print("KERNEL_OK")
</pallas_src>

<mosaic_0001>
module attributes {stable_mosaic.version = 11 : i64} {
  func.func @_mlp_kernel(%arg0: i32, %arg1: memref<16x784xf32, #tpu.memory_space<vmem>>, %arg2: memref<784x512xbf16, #tpu.memory_space<vmem>>, %arg3: memref<1x512xf32, #tpu.memory_space<vmem>>, %arg4: memref<512x128xbf16, #tpu.memory_space<vmem>>, %arg5: memref<1x128xf32, #tpu.memory_space<vmem>>, %arg6: memref<16x128xbf16, #tpu.memory_space<vmem>>) attributes {dimension_semantics = [#tpu.dimension_semantics<parallel>], iteration_bounds = array<i64: 2>, scalar_prefetch = 0 : i64, scratch_operands = 0 : i64, tpu.core_type = #tpu.core_type<tc>, window_params = [{transform_indices = @transform_0, window_bounds = array<i64: 16, 784>}, {pipeline_mode = #tpu.pipeline_mode<synchronous>, transform_indices = @transform_1, window_bounds = array<i64: 784, 512>}, {pipeline_mode = #tpu.pipeline_mode<synchronous>, transform_indices = @transform_2, window_bounds = array<i64: 1, 512>}, {pipeline_mode = #tpu.pipeline_mode<synchronous>, transform_indices = @transform_3, window_bounds = array<i64: 512, 128>}, {pipeline_mode = #tpu.pipeline_mode<synchronous>, transform_indices = @transform_4, window_bounds = array<i64: 1, 128>}, {transform_indices = @transform_5, window_bounds = array<i64: 16, 128>}]} {
    %c0 = arith.constant 0 : index
    %c0_0 = arith.constant 0 : index
    %0 = vector.load %arg1[%c0, %c0_0] : memref<16x784xf32, #tpu.memory_space<vmem>>, vector<16x784xf32>
    %1 = arith.truncf %0 : vector<16x784xf32> to vector<16x784xbf16>
    %c0_1 = arith.constant 0 : index
    %c0_2 = arith.constant 0 : index
    %2 = vector.load %arg2[%c0_1, %c0_2] : memref<784x512xbf16, #tpu.memory_space<vmem>>, vector<784x512xbf16>
    %cst = arith.constant dense<0.000000e+00> : vector<16x512xf32>
    %3 = tpu.matmul %1, %2, %cst {dimension_numbers = #tpu.dot_dimension_numbers<[1], [0], [0], [1], [0, 0, 1, 1], [], []>} : vector<16x784xbf16>, vector<784x512xbf16>, vector<16x512xf32> -> vector<16x512xf32>
    %c0_3 = arith.constant 0 : index
    %c0_4 = arith.constant 0 : index
    %4 = vector.load %arg3[%c0_3, %c0_4] : memref<1x512xf32, #tpu.memory_space<vmem>>, vector<1x512xf32>
    %5 = vector.broadcast %4 : vector<1x512xf32> to vector<16x512xf32>
    %6 = arith.addf %3, %5 : vector<16x512xf32>
    %cst_5 = arith.constant 0.000000e+00 : f32
    %7 = vector.broadcast %cst_5 : f32 to vector<16x512xf32>
    %8 = arith.maximumf %6, %7 : vector<16x512xf32>
    %9 = arith.truncf %8 : vector<16x512xf32> to vector<16x512xbf16>
    %c0_6 = arith.constant 0 : index
    %c0_7 = arith.constant 0 : index
    %10 = vector.load %arg4[%c0_6, %c0_7] : memref<512x128xbf16, #tpu.memory_space<vmem>>, vector<512x128xbf16>
    %cst_8 = arith.constant dense<0.000000e+00> : vector<16x128xf32>
    %11 = tpu.matmul %9, %10, %cst_8 {dimension_numbers = #tpu.dot_dimension_numbers<[1], [0], [0], [1], [0, 0, 1, 1], [], []>} : vector<16x512xbf16>, vector<512x128xbf16>, vector<16x128xf32> -> vector<16x128xf32>
    %c0_9 = arith.constant 0 : index
    %c0_10 = arith.constant 0 : index
    %12 = vector.load %arg5[%c0_9, %c0_10] : memref<1x128xf32, #tpu.memory_space<vmem>>, vector<1x128xf32>
    %13 = vector.broadcast %12 : vector<1x128xf32> to vector<16x128xf32>
    %14 = arith.addf %11, %13 : vector<16x128xf32>
    %15 = arith.truncf %14 : vector<16x128xf32> to vector<16x128xbf16>
    %c0_11 = arith.constant 0 : index
    %c0_12 = arith.constant 0 : index
    %16 = vector.load %arg6[%c0_11, %c0_12] : memref<16x128xbf16, #tpu.memory_space<vmem>>, vector<16x128xbf16>
    tpu.vector_store %arg6[%c0_11, %c0_12], %15 {strides = array<i32>} : memref<16x128xbf16, #tpu.memory_space<vmem>>, vector<16x128xbf16>,
    return
  }
  func.func @transform_0(%arg0: i32) -> (i32, i32) {
    %c0_i32 = arith.constant 0 : i32
    %c0_i32_0 = arith.constant 0 : i32
    return %arg0, %c0_i32 : i32, i32
  }
  func.func @transform_1(%arg0: i32) -> (i32, i32) {
    %c0_i32 = arith.constant 0 : i32
    %c0_i32_0 = arith.constant 0 : i32
    %c0_i32_1 = arith.constant 0 : i32
    return %c0_i32, %c0_i32_0 : i32, i32
  }
  func.func @transform_2(%arg0: i32) -> (i32, i32) {
    %c0_i32 = arith.constant 0 : i32
    %c0_i32_0 = arith.constant 0 : i32
    %c0_i32_1 = arith.constant 0 : i32
    return %c0_i32, %c0_i32_0 : i32, i32
  }
  func.func @transform_3(%arg0: i32) -> (i32, i32) {
    %c0_i32 = arith.constant 0 : i32
    %c0_i32_0 = arith.constant 0 : i32
    %c0_i32_1 = arith.constant 0 : i32
    return %c0_i32, %c0_i32_0 : i32, i32
  }
  func.func @transform_4(%arg0: i32) -> (i32, i32) {
    %c0_i32 = arith.constant 0 : i32
    %c0_i32_0 = arith.constant 0 : i32
    %c0_i32_1 = arith.constant 0 : i32
    return %c0_i32, %c0_i32_0 : i32, i32
  }
  func.func @transform_5(%arg0: i32) -> (i32, i32) {
    %c0_i32 = arith.constant 0 : i32
    %c0_i32_0 = arith.constant 0 : i32
    return %arg0, %c0_i32 : i32, i32
  }
}

</mosaic_0001>

<llo_original>
// kernel: tpu_custom_call.1
$region0: #{tpu_custom_call.1}
  #allocation0 [shape = 'u32[]', space=smem, size = 0x4, offset = 0x4, fixed_abs, tag = 'smem constant byte address 0x4 - core index']
  #allocation1 [shape = 'u32[144,128]{1,0:T(1,128)}', space=vmem, size = 0x12000, scoped, tag = 'internal scratch']
  %s0 = inlined_call_operand.hbm [shape: f32[32,784], index: 0, kind: input, shape index: {}]
  %s1 = inlined_call_operand.hbm [shape: bf16[784,512], index: 1, kind: input, shape index: {}]
  %s2 = inlined_call_operand.hbm [shape: f32[1,512], index: 2, kind: input, shape index: {}]
  %s3 = inlined_call_operand.hbm [shape: bf16[512,128], index: 3, kind: input, shape index: {}]
  %s4 = inlined_call_operand.vmem [shape: f32[1,128], index: 4, kind: input, shape index: {}]
  %s5 = inlined_call_operand.hbm [shape: bf16[32,128], index: 5, kind: output, shape index: {}]
  %s6 = sld [smem:[#allocation0]]
  $region69: #{tpu_custom_call.1} parent=0
    _
  %s8 = ssub.s32 1, %s6
  %s9 = scalar_select 0, %s8, %s6
  $region1: #{tpu_custom_call.1} parent=0
    #allocation2 [shape = 'u8[114688]{0}', space=vmem, size = 0x1c000, scoped, tag = 'input window, operand 0']
    #allocation3 [shape = 's32[2]{0}', space=sflag, size = 0x8, scoped, tag = 'scoped memory for tpu_custom_call.1']
    #allocation4 [shape = 's32[2]{0}', space=sflag, size = 0x8, scoped, tag = 'scoped memory for tpu_custom_call.1']
    #allocation5 [shape = 'u8[802816]{0}', space=vmem, size = 0xc4000, scoped, tag = 'input window, operand 1, single buffered']
    #allocation6 [shape = 's32[1]{0}', space=sflag, size = 0x4, scoped, tag = 'scoped memory for tpu_custom_call.1']
    #allocation7 [shape = 'u8[2048]{0}', space=vmem, size = 0x800, scoped, tag = 'input window, operand 2, single buffered']
    #allocation8 [shape = 'u8[131072]{0}', space=vmem, size = 0x20000, scoped, tag = 'input window, operand 3, single buffered']
    #allocation9 [shape = 's32[1]{0}', space=sflag, size = 0x4, scoped, tag = 'scoped memory for tpu_custom_call.1']
    #allocation10 [shape = 'u8[8192]{0}', space=vmem, size = 0x2000, scoped, tag = 'output window, operand 0']
    %10 = vsyncpa [#allocation3], 0
    %s11 = scalar_lea.sflag [#allocation3], 1
    %12 = vsyncpa %s11, 0
    %13 = vsyncpa [#allocation6], 0
    %14 = vsyncpa [#allocation9], 0
    %15 = vsyncpa [#allocation4], 0
    %s16 = scalar_lea.sflag [#allocation4], 1
    %17 = vsyncpa %s16, 0
    loop: start=0, step=1, limit=4
    $region2: #{tpu_custom_call.1} parent=1 // loop_pre_header
      _
    $region3: #{tpu_custom_call.1} parent=1 // loop_header
      %s19 = sphi 0, %s23
      %p20 = scmp.ge.s32.totalorder %s19, 4
      %s29 = sphi 0, %s31
      %s32 = sphi 0, %s29
      %s33 = sphi 0, %s32
      %s49 = sphi 0, %s33
      %s53 = sphi 0, %s53
      %s55 = sphi 0, %s53
      %s56 = sphi 0, %s55
      %s70 = sphi 0, %s56
      %s74 = sphi 0, %s74
      %s76 = sphi 0, %s74
      %s77 = sphi 0, %s76
      %s91 = sphi 0, %s77
      %s95 = sphi 0, %s95
      %s97 = sphi 0, %s95
      %s98 = sphi 0, %s97
      %s112 = sphi 0, %s98
      %s116 = sphi 0, %s116
      %s118 = sphi 0, %s116
      %s119 = sphi 0, %s118
      %s133 = sphi 0, %s119
      %s139 = sphi 0, %s141
      %s142 = sphi 0, %s139
      %s143 = sphi 0, %s142
      %s159 = sphi 0, %s143
    $region4: #{tpu_custom_call.1} parent=1 // loop_header_branch
      %22 = sbr.rel (%p20) target = $region8
    $region5: #{tpu_custom_call.1} parent=1 // loop_body
      %s24 = ssub.s32 %s19, 1
      %s25 = ssub.s32 %s19, 2
      %s26 = sadd.s32 %s19, 1
      %s27 = ssub.s32 %s19, %s26
      %p28 = scmp.eq.s32.totalorder %s27, 0
      %s30 = sadd.s32 %s29, 1
      %s31 = scalar_select %p28, %s29, %s30
      %p34 = pneg %p28
      %p35 = scmp.eq.s32.totalorder %s19, 1
      %p36 = por %p34, %p35
      %p37 = scmp.ne.s32.totalorder %s29, %s32
      %p38 = scmp.eq.s32.totalorder %s19, 0
      %p39 = por %p37, %p38
      %p40 = scmp.ne.s32.totalorder %s29, %s32
      %p41 = scmp.eq.s32.totalorder %s24, 1
      %p42 = por %p40, %p41
      %p43 = scmp.ne.s32.totalorder %s32, %s33
      %p44 = scmp.eq.s32.totalorder %s24, 0
      %p45 = por %p43, %p44
      %p46 = scmp.ne.s32.totalorder %s32, %s33
      %p47 = scmp.eq.s32.totalorder %s25, 1
      %p48 = por %p46, %p47
      %p50 = scmp.ne.s32.totalorder %s33, %s49
      %p51 = scmp.eq.s32.totalorder %s25, 0
      %p52 = por %p50, %p51
      %s54 = sadd.s32 %s53, 1
      %p57 = scmp.eq.s32.totalorder %s19, 1
      %p58 = scmp.ne.s32.totalorder %s53, %s55
      %p59 = scmp.eq.s32.totalorder %s19, 0
      %p60 = por %p58, %p59
      %p61 = scmp.ne.s32.totalorder %s53, %s55
      %p62 = scmp.eq.s32.totalorder %s24, 1
      %p63 = por %p61, %p62
      %p64 = scmp.ne.s32.totalorder %s55, %s56
      %p65 = scmp.eq.s32.totalorder %s24, 0
      %p66 = por %p64, %p65
      %p67 = scmp.ne.s32.totalorder %s55, %s56
      %p68 = scmp.eq.s32.totalorder %s25, 1
      %p69 = por %p67, %p68
      %p71 = scmp.ne.s32.totalorder %s56, %s70
      %p72 = scmp.eq.s32.totalorder %s25, 0
      %p73 = por %p71, %p72
      %s75 = sadd.s32 %s74, 1
      %p78 = scmp.eq.s32.totalorder %s19, 1
      %p79 = scmp.ne.s32.totalorder %s74, %s76
      %p80 = scmp.eq.s32.totalorder %s19, 0
      %p81 = por %p79, %p80
      %p82 = scmp.ne.s32.totalorder %s74, %s76
      %p83 = scmp.eq.s32.totalorder %s24, 1
      %p84 = por %p82, %p83
      %p85 = scmp.ne.s32.totalorder %s76, %s77
      %p86 = scmp.eq.s32.totalorder %s24, 0
      %p87 = por %p85, %p86
      %p88 = scmp.ne.s32.totalorder %s76, %s77
      %p89 = scmp.eq.s32.totalorder %s25, 1
      %p90 = por %p88, %p89
      %p92 = scmp.ne.s32.totalorder %s77, %s91
      %p93 = scmp.eq.s32.totalorder %s25, 0
      %p94 = por %p92, %p93
      %s96 = sadd.s32 %s95, 1
      %p99 = scmp.eq.s32.totalorder %s19, 1
      %p100 = scmp.ne.s32.totalorder %s95, %s97
      %p101 = scmp.eq.s32.totalorder %s19, 0
      %p102 = por %p100, %p101
      %p103 = scmp.ne.s32.totalorder %s95, %s97
      %p104 = scmp.eq.s32.totalorder %s24, 1
      %p105 = por %p103, %p104
      %p106 = scmp.ne.s32.totalorder %s97, %s98
      %p107 = scmp.eq.s32.totalorder %s24, 0
      %p108 = por %p106, %p107
      %p109 = scmp.ne.s32.totalorder %s97, %s98
      %p110 = scmp.eq.s32.totalorder %s25, 1
      %p111 = por %p109, %p110
      %p113 = scmp.ne.s32.totalorder %s98, %s112
      %p114 = scmp.eq.s32.totalorder %s25, 0
      %p115 = por %p113, %p114
      %s117 = sadd.s32 %s116, 1
      %p120 = scmp.eq.s32.totalorder %s19, 1
      %p121 = scmp.ne.s32.totalorder %s116, %s118
      %p122 = scmp.eq.s32.totalorder %s19, 0
      %p123 = por %p121, %p122
      %p124 = scmp.ne.s32.totalorder %s116, %s118
      %p125 = scmp.eq.s32.totalorder %s24, 1
      %p126 = por %p124, %p125
      %p127 = scmp.ne.s32.totalorder %s118, %s119
      %p128 = scmp.eq.s32.totalorder %s24, 0
      %p129 = por %p127, %p128
      %p130 = scmp.ne.s32.totalorder %s118, %s119
      %p131 = scmp.eq.s32.totalorder %s25, 1
      %p132 = por %p130, %p131
      %p134 = scmp.ne.s32.totalorder %s119, %s133
      %p135 = scmp.eq.s32.totalorder %s25, 0
      %p136 = por %p134, %p135
      %s137 = ssub.s32 %s19, %s26
      %p138 = scmp.eq.s32.totalorder %s137, 0
      %s140 = sadd.s32 %s139, 1
      %s141 = scalar_select %p138, %s139, %s140
      %p144 = pneg %p138
      %p145 = scmp.eq.s32.totalorder %s19, 1
      %p146 = por %p144, %p145
      %p147 = scmp.ne.s32.totalorder %s139, %s142
      %p148 = scmp.eq.s32.totalorder %s19, 0
      %p149 = por %p147, %p148
      %p150 = scmp.ne.s32.totalorder %s139, %s142
      %p151 = scmp.eq.s32.totalorder %s24, 1
      %p152 = por %p150, %p151
      %p153 = scmp.ne.s32.totalorder %s142, %s143
      %p154 = scmp.eq.s32.totalorder %s24, 0
      %p155 = por %p153, %p154
      %p156 = scmp.ne.s32.totalorder %s142, %s143
      %p157 = scmp.eq.s32.totalorder %s25, 1
      %p158 = por %p156, %p157
      %p160 = scmp.ne.s32.totalorder %s143, %s159
      %p161 = scmp.eq.s32.totalorder %s25, 0
      %p162 = por %p160, %p161
      %p163 = scmp.le.s32.totalorder 1, %s19
      %p164 = scmp.lt.s32.totalorder %s19, 3
      %p165 = pnand %p163, %p164
      %p166 = pneg %p165
      // Predicated region
      $region9: #{tpu_custom_call.1} parent=5 // pred_check
        _
      $region10: #{tpu_custom_call.1} parent=5 // pred_check_branch
        %168 = sbr.rel (%p165) target = $region12
      $region11: #{tpu_custom_call.1} parent=5 // pred_region
        %s169 = ssub.s32 %s19, 1
        // Predicated region
        $region13: #{tpu_custom_call.1} parent=11 // pred_check
          %p170 = pneg %p66
        $region14: #{tpu_custom_call.1} parent=11 // pred_check_branch
          %172 = sbr.rel (%p170) target = $region16
        $region15: #{tpu_custom_call.1} parent=11 // pred_region
          %s174 = ssub.s32 25088, 25088
          %175 = vsyncadd [#allocation6], %s174
          %s176 = sshll.u32 [#allocation5], 4
          %s177 = int_to_ptr.vmem [resolvable:$true] %s176
          %182 = dma.hbm_to_vmem [thread:$0]  %s1, 25088, %s177, [#allocation6], 256, 256, 16
        $region16: #{tpu_custom_call.1} parent=11 // pred_fallthru
          _
        // Predicated region
        $region17: #{tpu_custom_call.1} parent=11 // pred_check
          %p183 = pneg %p87
        $region18: #{tpu_custom_call.1} parent=11 // pred_check_branch
          %185 = sbr.rel (%p183) target = $region20
        $region19: #{tpu_custom_call.1} parent=11 // pred_region
          %s187 = ssub.s32 64, 64
          %188 = vsyncadd [#allocation6], %s187
          %s190 = sshll.u32 [#allocation7], 4
          %s191 = int_to_ptr.vmem [resolvable:$true] %s190
          %193 = dma.hbm_to_vmem [thread:$0]  %s2, 64, %s191, [#allocation6]
        $region20: #{tpu_custom_call.1} parent=11 // pred_fallthru
          _
        // Predicated region
        $region21: #{tpu_custom_call.1} parent=11 // pred_check
          %p194 = pneg %p108
        $region22: #{tpu_custom_call.1} parent=11 // pred_check_branch
          %196 = sbr.rel (%p194) target = $region24
        $region23: #{tpu_custom_call.1} parent=11 // pred_region
          %s198 = ssub.s32 4096, 4096
          %199 = vsyncadd [#allocation9], %s198
          %s200 = sshll.u32 [#allocation8], 4
          %s201 = int_to_ptr.vmem [resolvable:$true] %s200
          %206 = dma.hbm_to_vmem [thread:$0]  %s3, 4096, %s201, [#allocation9], 64, 64, 4
        $region24: #{tpu_custom_call.1} parent=11 // pred_fallthru
          _
        // Predicated region
        $region25: #{tpu_custom_call.1} parent=11 // pred_check
          %p207 = pneg %p129
        $region26: #{tpu_custom_call.1} parent=11 // pred_check_branch
          %209 = sbr.rel (%p207) target = $region28
        $region27: #{tpu_custom_call.1} parent=11 // pred_region
          _
        $region28: #{tpu_custom_call.1} parent=11 // pred_fallthru
          _
      $region12: #{tpu_custom_call.1} parent=5 // pred_fallthru
        _
      %p210 = scmp.lt.s32.totalorder %s19, 2
      // Predicated region
      $region29: #{tpu_custom_call.1} parent=5 // pred_check
        %p211 = pneg %p210
      $region30: #{tpu_custom_call.1} parent=5 // pred_check_branch
        %213 = sbr.rel (%p211) target = $region32
      $region31: #{tpu_custom_call.1} parent=5 // pred_region
        // Predicated region
        $region33: #{tpu_custom_call.1} parent=31 // pred_check
          %p214 = pneg %p39
        $region34: #{tpu_custom_call.1} parent=31 // pred_check_branch
          %216 = sbr.rel (%p214) target = $region36
        $region35: #{tpu_custom_call.1} parent=31 // pred_region
          %s217 = sand.u32 %s29, 1
          %s218 = scalar_lea.sflag [#allocation3], %s217
          %s219 = sand.u32 %s29, 1
          %s220 = smul.addr %s219, 112
          %s221 = scalar_lea.vmem [#allocation2], %s220
          %s222 = smul.u32 2, %s19
          %s224 = ssub.s32 1792, 1792
          %225 = vsyncadd %s218, %s224
          %s226 = smul.addr %s222, 7
          %s227 = smul.addr %s226, 128
          %s228 = scalar_lea.hbm %s0, %s227
          %s229 = sshll.u32 %s221, 4
          %s230 = int_to_ptr.vmem [resolvable:$true] %s229
          %235 = dma.hbm_to_vmem [thread:$0]  %s228, 1792, %s230, %s218, 896, 896, 56
        $region36: #{tpu_custom_call.1} parent=31 // pred_fallthru
          _
      $region32: #{tpu_custom_call.1} parent=5 // pred_fallthru
        _
      %p236 = scmp.le.s32.totalorder 1, %s19
      %p237 = scmp.lt.s32.totalorder %s19, 3
      %p238 = pnand %p236, %p237
      %p239 = pneg %p238
      // Predicated region
      $region37: #{tpu_custom_call.1} parent=5 // pred_check
        _
      $region38: #{tpu_custom_call.1} parent=5 // pred_check_branch
        %241 = sbr.rel (%p238) target = $region40
      $region39: #{tpu_custom_call.1} parent=5 // pred_region
        %s242 = ssub.s32 %s19, 1
        %s243 = sand.u32 %s32, 1
        %s244 = scalar_lea.sflag [#allocation3], %s243
        %s245 = sand.u32 %s32, 1
        %s246 = smul.addr %s245, 112
        %s247 = scalar_lea.vmem [#allocation2], %s246
        // Predicated region
        $region41: #{tpu_custom_call.1} parent=39 // pred_check
          %p248 = pneg %p45
        $region42: #{tpu_custom_call.1} parent=39 // pred_check_branch
          %250 = sbr.rel (%p248) target = $region44
        $region43: #{tpu_custom_call.1} parent=39 // pred_region
          %251 = dma.done %s244, 1792
        $region44: #{tpu_custom_call.1} parent=39 // pred_fallthru
          _
        // Predicated region
        $region45: #{tpu_custom_call.1} parent=39 // pred_check
          %p252 = pneg %p66
        $region46: #{tpu_custom_call.1} parent=39 // pred_check_branch
          %254 = sbr.rel (%p252) target = $region48
        $region47: #{tpu_custom_call.1} parent=39 // pred_region
          %255 = dma.done [#allocation6], 25088
        $region48: #{tpu_custom_call.1} parent=39 // pred_fallthru
          _
        // Predicated region
        $region49: #{tpu_custom_call.1} parent=39 // pred_check
          %p256 = pneg %p87
        $region50: #{tpu_custom_call.1} parent=39 // pred_check_branch
          %258 = sbr.rel (%p256) target = $region52
        $region51: #{tpu_custom_call.1} parent=39 // pred_region
          %259 = dma.done [#allocation6], 64
        $region52: #{tpu_custom_call.1} parent=39 // pred_fallthru
          _
        // Predicated region
        $region53: #{tpu_custom_call.1} parent=39 // pred_check
          %p260 = pneg %p108
        $region54: #{tpu_custom_call.1} parent=39 // pred_check_branch
          %262 = sbr.rel (%p260) target = $region56
        $region55: #{tpu_custom_call.1} parent=39 // pred_region
          %263 = dma.done [#allocation9], 4096
        $region56: #{tpu_custom_call.1} parent=39 // pred_fallthru
          _
        %s264 = sand.u32 %s32, 1
        %s265 = scalar_lea.sflag [#allocation3], %s264
        %s266 = sand.u32 %s32, 1
        %s267 = smul.addr %s266, 112
        %s268 = scalar_lea.vmem [#allocation2], %s267
        %p269 = pneg %p45
        %p270 = pneg %p42
        %p271 = pneg %p66
        %p272 = pneg %p63
        %p273 = pneg %p87
        %p274 = pneg %p84
        %p275 = pneg %p108
        %p276 = pneg %p105
        %p277 = pneg %p129
        %p278 = pneg %p126
        %p279 = pneg %p155
        %p280 = pneg %p152
        %s281 = sand.u32 %s142, 1
        %s282 = scalar_lea.sflag [#allocation4], %s281
        %s283 = sand.u32 %s142, 1
        %s284 = smul.addr %s283, 8
        %s285 = scalar_lea.vmem [#allocation10], %s284
        %s286 = smul.u32 2, %s24
        %s287 = smul.u32 2, %s24
        %v289 = vld [vmem:[%s247] sm:$0xff]
        %v290 = vld [vmem:[%s247 + $0x8] sm:$0xff]
        %v291 = vld [vmem:[%s247 + $0x10] sm:$0xff]
        %v292 = vld [vmem:[%s247 + $0x18] sm:$0xff]
        %v293 = vld [vmem:[%s247 + $0x20] sm:$0xff]
        %v294 = vld [vmem:[%s247 + $0x28] sm:$0xff]
        %v295 = vld [vmem:[%s247 + $0x30] sm:$0xff]
        %v296 = vld [vmem:[%s247 + $0x38] sm:$0xff]
        %v297 = vld [vmem:[%s247 + $0x40] sm:$0xff]
        %v298 = vld [vmem:[%s247 + $0x48] sm:$0xff]
        %v299 = vld [vmem:[%s247 + $0x50] sm:$0xff]
        %v300 = vld [vmem:[%s247 + $0x58] sm:$0xff]
        %v301 = vld [vmem:[%s247 + $0x60] sm:$0xff]
        %v302 = vld [vmem:[%s247 + $0x68] sm:$0xff]
        %v303 = vpack.c.bf16 %v296, %v289
        %v304 = vpack.c.bf16 %v297, %v290
        %v305 = vpack.c.bf16 %v298, %v291
        %v306 = vpack.c.bf16 %v299, %v292
        %v307 = vpack.c.bf16 %v300, %v293
        %v308 = vpack.c.bf16 %v301, %v294
        %v309 = vpack.c.bf16 %v302, %v295
        %v310 = vld [vmem:[#allocation5] sm:$0xff]
        %v311 = vld [vmem:[#allocation5 + $0x8] sm:$0xff]
        %v312 = vld [vmem:[#allocation5 + $0x10] sm:$0xff]
        %v313 = vld [vmem:[#allocation5 + $0x18] sm:$0xff]
        %v314 = vld [vmem:[#allocation5 + $0x20] sm:$0xff]
        %v315 = vld [vmem:[#allocation5 + $0x28] sm:$0xff]
        %v316 = vld [vmem:[#allocation5 + $0x30] sm:$0xff]
        %v317 = vld [vmem:[#allocation5 + $0x38] sm:$0xff]
        %v318 = vld [vmem:[#allocation5 + $0x40] sm:$0xff]
        %v319 = vld [vmem:[#allocation5 + $0x48] sm:$0xff]
        %v320 = vld [vmem:[#allocation5 + $0x50] sm:$0xff]
        %v321 = vld [vmem:[#allocation5 + $0x58] sm:$0xff]
        %v322 = vld [vmem:[#allocation5 + $0x60] sm:$0xff]
        %v323 = vld [vmem:[#allocation5 + $0x68] sm:$0xff]
        %v324 = vld [vmem:[#allocation5 + $0x70] sm:$0xff]
        %v325 = vld [vmem:[#allocation5 + $0x78] sm:$0xff]
        %v326 = vld [vmem:[#allocation5 + $0x80] sm:$0xff]
        %v327 = vld [vmem:[#allocation5 + $0x88] sm:$0xff]
        %v328 = vld [vmem:[#allocation5 + $0x90] sm:$0xff]
        %v329 = vld [vmem:[#allocation5 + $0x98] sm:$0xff]
        %v330 = vld [vmem:[#allocation5 + $0xa0] sm:$0xff]
        %v331 = vld [vmem:[#allocation5 + $0xa8] sm:$0xff]
        %v332 = vld [vmem:[#allocation5 + $0xb0] sm:$0xff]
        %v333 = vld [vmem:[#allocation5 + $0xb8] sm:$0xff]
        %v334 = vld [vmem:[#allocation5 + $0xc0] sm:$0xff]
        %v335 = vld [vmem:[#allocation5 + $0xc8] sm:$0xff]
        %v336 = vld [vmem:[#allocation5 + $0xd0] sm:$0xff]
        %v337 = vld [vmem:[#allocation5 + $0xd8] sm:$0xff]
        %v338 = vld [vmem:[#allocation5 + $0xe0] sm:$0xff]
        %v339 = vld [vmem:[#allocation5 + $0xe8] sm:$0xff]
        %v340 = vld [vmem:[#allocation5 + $0xf0] sm:$0xff]
        %v341 = vld [vmem:[#allocation5 + $0xf8] sm:$0xff]
        %v342 = vld [vmem:[#allocation5 + $0x100] sm:$0xff]
        %v343 = vld [vmem:[#allocation5 + $0x108] sm:$0xff]
        %v344 = vld [vmem:[#allocation5 + $0x110] sm:$0xff]
        %v345 = vld [vmem:[#allocation5 + $0x118] sm:$0xff]
        %v346 = vld [vmem:[#allocation5 + $0x120] sm:$0xff]
        %v347 = vld [vmem:[#allocation5 + $0x128] sm:$0xff]
        %v348 = vld [vmem:[#allocation5 + $0x130] sm:$0xff]
        %v349 = vld [vmem:[#allocation5 + $0x138] sm:$0xff]
        %v350 = vld [vmem:[#allocation5 + $0x140] sm:$0xff]
        %v351 = vld [vmem:[#allocation5 + $0x148] sm:$0xff]
        %v352 = vld [vmem:[#allocation5 + $0x150] sm:$0xff]
        %v353 = vld [vmem:[#allocation5 + $0x158] sm:$0xff]
        %v354 = vld [vmem:[#allocation5 + $0x160] sm:$0xff]
        %v355 = vld [vmem:[#allocation5 + $0x168] sm:$0xff]
        %v356 = vld [vmem:[#allocation5 + $0x170] sm:$0xff]
        %v357 = vld [vmem:[#allocation5 + $0x178] sm:$0xff]
        %v358 = vld [vmem:[#allocation5 + $0x180] sm:$0xff]
        %v359 = vld [vmem:[#allocation5 + $0x188] sm:$0xff]
        %v360 = vld [vmem:[#allocation5 + $0x190] sm:$0xff]
        %v361 = vld [vmem:[#allocation5 + $0x198] sm:$0xff]
        %v362 = vld [vmem:[#allocation5 + $0x1a0] sm:$0xff]
        %v363 = vld [vmem:[#allocation5 + $0x1a8] sm:$0xff]
        %v364 = vld [vmem:[#allocation5 + $0x1b0] sm:$0xff]
        %v365 = vld [vmem:[#allocation5 + $0x1b8] sm:$0xff]
        %v366 = vld [vmem:[#allocation5 + $0x1c0] sm:$0xff]
        %v367 = vld [vmem:[#allocation5 + $0x1c8] sm:$0xff]
        %v368 = vld [vmem:[#allocation5 + $0x1d0] sm:$0xff]
        %v369 = vld [vmem:[#allocation5 + $0x1d8] sm:$0xff]
        %v370 = vld [vmem:[#allocation5 + $0x1e0] sm:$0xff]
        %v371 = vld [vmem:[#allocation5 + $0x1e8] sm:$0xff]
        %v372 = vld [vmem:[#allocation5 + $0x1f0] sm:$0xff]
        %v373 = vld [vmem:[#allocation5 + $0x1f8] sm:$0xff]
        %v374 = vld [vmem:[#allocation5 + $0x200] sm:$0xff]
        %v375 = vld [vmem:[#allocation5 + $0x208] sm:$0xff]
        %v376 = vld [vmem:[#allocation5 + $0x210] sm:$0xff]
        %v377 = vld [vmem:[#allocation5 + $0x218] sm:$0xff]
        %v378 = vld [vmem:[#allocation5 + $0x220] sm:$0xff]
        %v379 = vld [vmem:[#allocation5 + $0x228] sm:$0xff]
        %v380 = vld [vmem:[#allocation5 + $0x230] sm:$0xff]
        %v381 = vld [vmem:[#allocation5 + $0x238] sm:$0xff]
        %v382 = vld [vmem:[#allocation5 + $0x240] sm:$0xff]
        %v383 = vld [vmem:[#allocation5 + $0x248] sm:$0xff]
        %v384 = vld [vmem:[#allocation5 + $0x250] sm:$0xff]
        %v385 = vld [vmem:[#allocation5 + $0x258] sm:$0xff]
        %v386 = vld [vmem:[#allocation5 + $0x260] sm:$0xff]
        %v387 = vld [vmem:[#allocation5 + $0x268] sm:$0xff]
        %v388 = vld [vmem:[#allocation5 + $0x270] sm:$0xff]
        %v389 = vld [vmem:[#allocation5 + $0x278] sm:$0xff]
        %v390 = vld [vmem:[#allocation5 + $0x280] sm:$0xff]
        %v391 = vld [vmem:[#allocation5 + $0x288] sm:$0xff]
        %v392 = vld [vmem:[#allocation5 + $0x290] sm:$0xff]
        %v393 = vld [vmem:[#allocation5 + $0x298] sm:$0xff]
        %v394 = vld [vmem:[#allocation5 + $0x2a0] sm:$0xff]
        %v395 = vld [vmem:[#allocation5 + $0x2a8] sm:$0xff]
        %v396 = vld [vmem:[#allocation5 + $0x2b0] sm:$0xff]
        %v397 = vld [vmem:[#allocation5 + $0x2b8] sm:$0xff]
        %v398 = vld [vmem:[#allocation5 + $0x2c0] sm:$0xff]
        %v399 = vld [vmem:[#allocation5 + $0x2c8] sm:$0xff]
        %v400 = vld [vmem:[#allocation5 + $0x2d0] sm:$0xff]
        %v401 = vld [vmem:[#allocation5 + $0x2d8] sm:$0xff]
        %v402 = vld [vmem:[#allocation5 + $0x2e0] sm:$0xff]
        %v403 = vld [vmem:[#allocation5 + $0x2e8] sm:$0xff]
        %v404 = vld [vmem:[#allocation5 + $0x2f0] sm:$0xff]
        %v405 = vld [vmem:[#allocation5 + $0x2f8] sm:$0xff]
        %v406 = vld [vmem:[#allocation5 + $0x300] sm:$0xff]
        %v407 = vld [vmem:[#allocation5 + $0x308] sm:$0xff]
        %v408 = vld [vmem:[#allocation5 + $0x310] sm:$0xff]
        %v409 = vld [vmem:[#allocation5 + $0x318] sm:$0xff]
        %v410 = vld [vmem:[#allocation5 + $0x320] sm:$0xff]
        %v411 = vld [vmem:[#allocation5 + $0x328] sm:$0xff]
        %v412 = vld [vmem:[#allocation5 + $0x330] sm:$0xff]
        %v413 = vld [vmem:[#allocation5 + $0x338] sm:$0xff]
        %v414 = vld [vmem:[#allocation5 + $0x340] sm:$0xff]
        %v415 = vld [vmem:[#allocation5 + $0x348] sm:$0xff]
        %v416 = vld [vmem:[#allocation5 + $0x350] sm:$0xff]
        %v417 = vld [vmem:[#allocation5 + $0x358] sm:$0xff]
        %v418 = vld [vmem:[#allocation5 + $0x360] sm:$0xff]
        %v419 = vld [vmem:[#allocation5 + $0x368] sm:$0xff]
        %v420 = vld [vmem:[#allocation5 + $0x370] sm:$0xff]
        %v421 = vld [vmem:[#allocation5 + $0x378] sm:$0xff]
        %v422 = vld [vmem:[#allocation5 + $0x380] sm:$0xff]
        %v423 = vld [vmem:[#allocation5 + $0x388] sm:$0xff]
        %v424 = vld [vmem:[#allocation5 + $0x390] sm:$0xff]
        %v425 = vld [vmem:[#allocation5 + $0x398] sm:$0xff]
        %v426 = vld [vmem:[#allocation5 + $0x3a0] sm:$0xff]
        %v427 = vld [vmem:[#allocation5 + $0x3a8] sm:$0xff]
        %v428 = vld [vmem:[#allocation5 + $0x3b0] sm:$0xff]
        %v429 = vld [vmem:[#allocation5 + $0x3b8] sm:$0xff]
        %v430 = vld [vmem:[#allocation5 + $0x3c0] sm:$0xff]
        %v431 = vld [vmem:[#allocation5 + $0x3c8] sm:$0xff]
        %v432 = vld [vmem:[#allocation5 + $0x3d0] sm:$0xff]
        %v433 = vld [vmem:[#allocation5 + $0x3d8] sm:$0xff]
        %v434 = vld [vmem:[#allocation5 + $0x3e0] sm:$0xff]
        %v435 = vld [vmem:[#allocation5 + $0x3e8] sm:$0xff]
        %v436 = vld [vmem:[#allocation5 + $0x3f0] sm:$0xff]
        %v437 = vld [vmem:[#allocation5 + $0x3f8] sm:$0xff]
        %v438 = vld [vmem:[#allocation5 + $0x400] sm:$0xff]
        %v439 = vld [vmem:[#allocation5 + $0x408] sm:$0xff]
        %v440 = vld [vmem:[#allocation5 + $0x410] sm:$0xff]
        %v441 = vld [vmem:[#allocation5 + $0x418] sm:$0xff]
        %v442 = vld [vmem:[#allocation5 + $0x420] sm:$0xff]
        %v443 = vld [vmem:[#allocation5 + $0x428] sm:$0xff]
        %v444 = vld [vmem:[#allocation5 + $0x430] sm:$0xff]
        %v445 = vld [vmem:[#allocation5 + $0x438] sm:$0xff]
        %v446 = vld [vmem:[#allocation5 + $0x440] sm:$0xff]
        %v447 = vld [vmem:[#allocation5 + $0x448] sm:$0xff]
        %v448 = vld [vmem:[#allocation5 + $0x450] sm:$0xff]
        %v449 = vld [vmem:[#allocation5 + $0x458] sm:$0xff]
        %v450 = vld [vmem:[#allocation5 + $0x460] sm:$0xff]
        %v451 = vld [vmem:[#allocation5 + $0x468] sm:$0xff]
        %v452 = vld [vmem:[#allocation5 + $0x470] sm:$0xff]
        %v453 = vld [vmem:[#allocation5 + $0x478] sm:$0xff]
        %v454 = vld [vmem:[#allocation5 + $0x480] sm:$0xff]
        %v455 = vld [vmem:[#allocation5 + $0x488] sm:$0xff]
        %v456 = vld [vmem:[#allocation5 + $0x490] sm:$0xff]
        %v457 = vld [vmem:[#allocation5 + $0x498] sm:$0xff]
        %v458 = vld [vmem:[#allocation5 + $0x4a0] sm:$0xff]
        %v459 = vld [vmem:[#allocation5 + $0x4a8] sm:$0xff]
        %v460 = vld [vmem:[#allocation5 + $0x4b0] sm:$0xff]
        %v461 = vld [vmem:[#allocation5 + $0x4b8] sm:$0xff]
        %v462 = vld [vmem:[#allocation5 + $0x4c0] sm:$0xff]
        %v463 = vld [vmem:[#allocation5 + $0x4c8] sm:$0xff]
        %v464 = vld [vmem:[#allocation5 + $0x4d0] sm:$0xff]
        %v465 = vld [vmem:[#allocation5 + $0x4d8] sm:$0xff]
        %v466 = vld [vmem:[#allocation5 + $0x4e0] sm:$0xff]
        %v467 = vld [vmem:[#allocation5 + $0x4e8] sm:$0xff]
        %v468 = vld [vmem:[#allocation5 + $0x4f0] sm:$0xff]
        %v469 = vld [vmem:[#allocation5 + $0x4f8] sm:$0xff]
        %v470 = vld [vmem:[#allocation5 + $0x500] sm:$0xff]
        %v471 = vld [vmem:[#allocation5 + $0x508] sm:$0xff]
        %v472 = vld [vmem:[#allocation5 + $0x510] sm:$0xff]
        %v473 = vld [vmem:[#allocation5 + $0x518] sm:$0xff]
        %v474 = vld [vmem:[#allocation5 + $0x520] sm:$0xff]
        %v475 = vld [vmem:[#allocation5 + $0x528] sm:$0xff]
        %v476 = vld [vmem:[#allocation5 + $0x530] sm:$0xff]
        %v477 = vld [vmem:[#allocation5 + $0x538] sm:$0xff]
        %v478 = vld [vmem:[#allocation5 + $0x540] sm:$0xff]
        %v479 = vld [vmem:[#allocation5 + $0x548] sm:$0xff]
        %v480 = vld [vmem:[#allocation5 + $0x550] sm:$0xff]
        %v481 = vld [vmem:[#allocation5 + $0x558] sm:$0xff]
        %v482 = vld [vmem:[#allocation5 + $0x560] sm:$0xff]
        %v483 = vld [vmem:[#allocation5 + $0x568] sm:$0xff]
        %v484 = vld [vmem:[#allocation5 + $0x570] sm:$0xff]
        %v485 = vld [vmem:[#allocation5 + $0x578] sm:$0xff]
        %v486 = vld [vmem:[#allocation5 + $0x580] sm:$0xff]
        %v487 = vld [vmem:[#allocation5 + $0x588] sm:$0xff]
        %v488 = vld [vmem:[#allocation5 + $0x590] sm:$0xff]
        %v489 = vld [vmem:[#allocation5 + $0x598] sm:$0xff]
        %v490 = vld [vmem:[#allocation5 + $0x5a0] sm:$0xff]
        %v491 = vld [vmem:[#allocation5 + $0x5a8] sm:$0xff]
        %v492 = vld [vmem:[#allocation5 + $0x5b0] sm:$0xff]
        %v493 = vld [vmem:[#allocation5 + $0x5b8] sm:$0xff]
        %v494 = vld [vmem:[#allocation5 + $0x5c0] sm:$0xff]
        %v495 = vld [vmem:[#allocation5 + $0x5c8] sm:$0xff]
        %v496 = vld [vmem:[#allocation5 + $0x5d0] sm:$0xff]
        %v497 = vld [vmem:[#allocation5 + $0x5d8] sm:$0xff]
        %v498 = vld [vmem:[#allocation5 + $0x5e0] sm:$0xff]
        %v499 = vld [vmem:[#allocation5 + $0x5e8] sm:$0xff]
        %v500 = vld [vmem:[#allocation5 + $0x5f0] sm:$0xff]
        %v501 = vld [vmem:[#allocation5 + $0x5f8] sm:$0xff]
        %v502 = vld [vmem:[#allocation5 + $0x600] sm:$0xff]
        %v503 = vld [vmem:[#allocation5 + $0x608] sm:$0xff]
        %v504 = vld [vmem:[#allocation5 + $0x610] sm:$0xff]
        %v505 = vld [vmem:[#allocation5 + $0x618] sm:$0xff]
        %v506 = vld [vmem:[#allocation7] sm:$0xf]
        %v508 = vlaneseq
        %v509 = vshrl.u32 %v508, 7
        %v510 = vsub.s32 0, %v509
        %v511 = vrot.slane %v506, %v510
        %v512 = vlaneseq
        %v513 = vshrl.u32 %v512, 7
        %v514 = vsub.s32 1, %v513
        %v515 = vrot.slane %v506, %v514
        %v516 = vlaneseq
        %v517 = vshrl.u32 %v516, 7
        %v518 = vsub.s32 2, %v517
        %v519 = vrot.slane %v506, %v518
        %v520 = vlaneseq
        %v521 = vshrl.u32 %v520, 7
        %v522 = vsub.s32 3, %v521
        %v523 = vrot.slane %v506, %v522
        %v724 = vunpack.c.l.b16 %v310
        %v725 = vunpack.c.h.b16 %v310
        %v726 = vunpack.c.l.b16 %v311
        %v727 = vunpack.c.h.b16 %v311
        %v728 = vunpack.c.l.b16 %v312
        %v729 = vunpack.c.h.b16 %v312
        %v730 = vunpack.c.l.b16 %v313
        %v731 = vunpack.c.h.b16 %v313
        %v732 = vunpack.c.l.b16 %v314
        %v733 = vunpack.c.h.b16 %v314
        %v734 = vunpack.c.l.b16 %v315
        %v735 = vunpack.c.h.b16 %v315
        %v736 = vunpack.c.l.b16 %v316
        %v737 = vunpack.c.h.b16 %v316
        %v738 = vunpack.c.l.b16 %v317
        %v739 = vunpack.c.h.b16 %v317
        %v740 = vunpack.c.l.b16 %v318
        %v741 = vunpack.c.h.b16 %v318
        %v742 = vunpack.c.l.b16 %v319
        %v743 = vunpack.c.h.b16 %v319
        %v744 = vunpack.c.l.b16 %v320
        %v745 = vunpack.c.h.b16 %v320
        %v746 = vunpack.c.l.b16 %v321
        %v747 = vunpack.c.h.b16 %v321
        %v748 = vunpack.c.l.b16 %v322
        %v749 = vunpack.c.h.b16 %v322
        %v750 = vunpack.c.l.b16 %v323
        %v751 = vunpack.c.h.b16 %v323
        %v752 = vunpack.c.l.b16 %v324
        %v753 = vunpack.c.h.b16 %v324
        %v754 = vunpack.c.l.b16 %v325
        %v755 = vunpack.c.h.b16 %v325
        %v756 = vunpack.c.l.b16 %v326
        %v757 = vunpack.c.h.b16 %v326
        %v758 = vunpack.c.l.b16 %v327
        %v759 = vunpack.c.h.b16 %v327
        %v760 = vunpack.c.l.b16 %v328
        %v761 = vunpack.c.h.b16 %v328
        %v762 = vunpack.c.l.b16 %v329
        %v763 = vunpack.c.h.b16 %v329
        %v764 = vunpack.c.l.b16 %v330
        %v765 = vunpack.c.h.b16 %v330
        %v766 = vunpack.c.l.b16 %v331
        %v767 = vunpack.c.h.b16 %v331
        %v768 = vunpack.c.l.b16 %v332
        %v769 = vunpack.c.h.b16 %v332
        %v770 = vunpack.c.l.b16 %v333
        %v771 = vunpack.c.h.b16 %v333
        %v772 = vunpack.c.l.b16 %v334
        %v773 = vunpack.c.h.b16 %v334
        %v774 = vunpack.c.l.b16 %v335
        %v775 = vunpack.c.h.b16 %v335
        %v776 = vunpack.c.l.b16 %v336
        %v777 = vunpack.c.h.b16 %v336
        %v778 = vunpack.c.l.b16 %v337
        %v779 = vunpack.c.h.b16 %v337
        %v780 = vunpack.c.l.b16 %v338
        %v781 = vunpack.c.h.b16 %v338
        %v782 = vunpack.c.l.b16 %v339
        %v783 = vunpack.c.h.b16 %v339
        %v784 = vunpack.c.l.b16 %v340
        %v785 = vunpack.c.h.b16 %v340
        %v786 = vunpack.c.l.b16 %v341
        %v787 = vunpack.c.h.b16 %v341
        %v788 = vunpack.c.l.b16 %v342
        %v789 = vunpack.c.h.b16 %v342
        %v790 = vunpack.c.l.b16 %v343
        %v791 = vunpack.c.h.b16 %v343
        %v792 = vunpack.c.l.b16 %v344
        %v793 = vunpack.c.h.b16 %v344
        %v794 = vunpack.c.l.b16 %v345
        %v795 = vunpack.c.h.b16 %v345
        %v796 = vunpack.c.l.b16 %v346
        %v797 = vunpack.c.h.b16 %v346
        %v798 = vunpack.c.l.b16 %v347
        %v799 = vunpack.c.h.b16 %v347
        %v800 = vunpack.c.l.b16 %v348
        %v801 = vunpack.c.h.b16 %v348
        %v802 = vunpack.c.l.b16 %v349
        %v803 = vunpack.c.h.b16 %v349
        %v804 = vunpack.c.l.b16 %v350
        %v805 = vunpack.c.h.b16 %v350
        %v806 = vunpack.c.l.b16 %v351
        %v807 = vunpack.c.h.b16 %v351
        %v808 = vunpack.c.l.b16 %v352
        %v809 = vunpack.c.h.b16 %v352
        %v810 = vunpack.c.l.b16 %v353
        %v811 = vunpack.c.h.b16 %v353
        %v812 = vunpack.c.l.b16 %v354
        %v813 = vunpack.c.h.b16 %v354
        %v814 = vunpack.c.l.b16 %v355
        %v815 = vunpack.c.h.b16 %v355
        %v816 = vunpack.c.l.b16 %v356
        %v817 = vunpack.c.h.b16 %v356
        %v818 = vunpack.c.l.b16 %v357
        %v819 = vunpack.c.h.b16 %v357
        %v820 = vunpack.c.l.b16 %v358
        %v821 = vunpack.c.h.b16 %v358
        %v822 = vunpack.c.l.b16 %v359
        %v823 = vunpack.c.h.b16 %v359
        %v824 = vunpack.c.l.b16 %v360
        %v825 = vunpack.c.h.b16 %v360
        %v826 = vunpack.c.l.b16 %v361
        %v827 = vunpack.c.h.b16 %v361
        %v828 = vunpack.c.l.b16 %v362
        %v829 = vunpack.c.h.b16 %v362
        %v830 = vunpack.c.l.b16 %v363
        %v831 = vunpack.c.h.b16 %v363
        %v832 = vunpack.c.l.b16 %v364
        %v833 = vunpack.c.h.b16 %v364
        %v834 = vunpack.c.l.b16 %v365
        %v835 = vunpack.c.h.b16 %v365
        %v836 = vunpack.c.l.b16 %v366
        %v837 = vunpack.c.h.b16 %v366
        %v838 = vunpack.c.l.b16 %v367
        %v839 = vunpack.c.h.b16 %v367
        %v840 = vunpack.c.l.b16 %v368
        %v841 = vunpack.c.h.b16 %v368
        %v842 = vunpack.c.l.b16 %v369
        %v843 = vunpack.c.h.b16 %v369
        %v844 = vunpack.c.l.b16 %v370
        %v845 = vunpack.c.h.b16 %v370
        %v846 = vunpack.c.l.b16 %v371
        %v847 = vunpack.c.h.b16 %v371
        %v848 = vunpack.c.l.b16 %v372
        %v849 = vunpack.c.h.b16 %v372
        %v850 = vunpack.c.l.b16 %v373
        %v851 = vunpack.c.h.b16 %v373
        %v852 = vunpack.c.l.b16 %v374
        %v853 = vunpack.c.h.b16 %v374
        %v854 = vunpack.c.l.b16 %v375
        %v855 = vunpack.c.h.b16 %v375
        %v856 = vunpack.c.l.b16 %v376
        %v857 = vunpack.c.h.b16 %v376
        %v858 = vunpack.c.l.b16 %v377
        %v859 = vunpack.c.h.b16 %v377
        %v860 = vunpack.c.l.b16 %v378
        %v861 = vunpack.c.h.b16 %v378
        %v862 = vunpack.c.l.b16 %v379
        %v863 = vunpack.c.h.b16 %v379
        %v864 = vunpack.c.l.b16 %v380
        %v865 = vunpack.c.h.b16 %v380
        %v866 = vunpack.c.l.b16 %v381
        %v867 = vunpack.c.h.b16 %v381
        %v868 = vunpack.c.l.b16 %v382
        %v869 = vunpack.c.h.b16 %v382
        %v870 = vunpack.c.l.b16 %v383
        %v871 = vunpack.c.h.b16 %v383
        %v872 = vunpack.c.l.b16 %v384
        %v873 = vunpack.c.h.b16 %v384
        %v874 = vunpack.c.l.b16 %v385
        %v875 = vunpack.c.h.b16 %v385
        %v876 = vunpack.c.l.b16 %v386
        %v877 = vunpack.c.h.b16 %v386
        %v878 = vunpack.c.l.b16 %v387
        %v879 = vunpack.c.h.b16 %v387
        %v880 = vunpack.c.l.b16 %v388
        %v881 = vunpack.c.h.b16 %v388
        %v882 = vunpack.c.l.b16 %v389
        %v883 = vunpack.c.h.b16 %v389
        %v884 = vunpack.c.l.b16 %v390
        %v885 = vunpack.c.h.b16 %v390
        %v886 = vunpack.c.l.b16 %v391
        %v887 = vunpack.c.h.b16 %v391
        %v888 = vunpack.c.l.b16 %v392
        %v889 = vunpack.c.h.b16 %v392
        %v890 = vunpack.c.l.b16 %v393
        %v891 = vunpack.c.h.b16 %v393
        %v892 = vunpack.c.l.b16 %v394
        %v893 = vunpack.c.h.b16 %v394
        %v894 = vunpack.c.l.b16 %v395
        %v895 = vunpack.c.h.b16 %v395
        %v896 = vunpack.c.l.b16 %v396
        %v897 = vunpack.c.h.b16 %v396
        %v898 = vunpack.c.l.b16 %v397
        %v899 = vunpack.c.h.b16 %v397
        %v900 = vunpack.c.l.b16 %v398
        %v901 = vunpack.c.h.b16 %v398
        %v902 = vunpack.c.l.b16 %v399
        %v903 = vunpack.c.h.b16 %v399
        %v904 = vunpack.c.l.b16 %v400
        %v905 = vunpack.c.h.b16 %v400
        %v906 = vunpack.c.l.b16 %v401
        %v907 = vunpack.c.h.b16 %v401
        %v908 = vunpack.c.l.b16 %v402
        %v909 = vunpack.c.h.b16 %v402
        %v910 = vunpack.c.l.b16 %v403
        %v911 = vunpack.c.h.b16 %v403
        %v912 = vunpack.c.l.b16 %v404
        %v913 = vunpack.c.h.b16 %v404
        %v914 = vunpack.c.l.b16 %v405
        %v915 = vunpack.c.h.b16 %v405
        %v916 = vunpack.c.l.b16 %v406
        %v917 = vunpack.c.h.b16 %v406
        %v918 = vunpack.c.l.b16 %v407
        %v919 = vunpack.c.h.b16 %v407
        %v920 = vunpack.c.l.b16 %v408
        %v921 = vunpack.c.h.b16 %v408
        %v922 = vunpack.c.l.b16 %v409
        %v923 = vunpack.c.h.b16 %v409
        %v924 = vunpack.c.l.b16 %v410
        %v925 = vunpack.c.h.b16 %v410
        %v926 = vunpack.c.l.b16 %v411
        %v927 = vunpack.c.h.b16 %v411
        %v928 = vunpack.c.l.b16 %v412
        %v929 = vunpack.c.h.b16 %v412
        %v930 = vunpack.c.l.b16 %v413
        %v931 = vunpack.c.h.b16 %v413
        %v932 = vunpack.c.l.b16 %v414
        %v933 = vunpack.c.h.b16 %v414
        %v934 = vunpack.c.l.b16 %v415
        %v935 = vunpack.c.h.b16 %v415
        %v936 = vunpack.c.l.b16 %v416
        %v937 = vunpack.c.h.b16 %v416
        %v938 = vunpack.c.l.b16 %v417
        %v939 = vunpack.c.h.b16 %v417
        %v940 = vunpack.c.l.b16 %v418
        %v941 = vunpack.c.h.b16 %v418
        %v942 = vunpack.c.l.b16 %v419
        %v943 = vunpack.c.h.b16 %v419
        %v944 = vunpack.c.l.b16 %v420
        %v945 = vunpack.c.h.b16 %v420
        %v946 = vunpack.c.l.b16 %v421
        %v947 = vunpack.c.h.b16 %v421
        %v948 = vunpack.c.l.b16 %v422
        %v949 = vunpack.c.h.b16 %v422
        %v950 = vunpack.c.l.b16 %v423
        %v951 = vunpack.c.h.b16 %v423
        %v952 = vunpack.c.l.b16 %v424
        %v953 = vunpack.c.h.b16 %v424
        %v954 = vunpack.c.l.b16 %v425
        %v955 = vunpack.c.h.b16 %v425
        %v956 = vunpack.c.l.b16 %v426
        %v957 = vunpack.c.h.b16 %v426
        %v958 = vunpack.c.l.b16 %v427
        %v959 = vunpack.c.h.b16 %v427
        %v960 = vunpack.c.l.b16 %v428
        %v961 = vunpack.c.h.b16 %v428
        %v962 = vunpack.c.l.b16 %v429
        %v963 = vunpack.c.h.b16 %v429
        %v964 = vunpack.c.l.b16 %v430
        %v965 = vunpack.c.h.b16 %v430
        %v966 = vunpack.c.l.b16 %v431
        %v967 = vunpack.c.h.b16 %v431
        %v968 = vunpack.c.l.b16 %v432
        %v969 = vunpack.c.h.b16 %v432
        %v970 = vunpack.c.l.b16 %v433
        %v971 = vunpack.c.h.b16 %v433
        %v972 = vunpack.c.l.b16 %v434
        %v973 = vunpack.c.h.b16 %v434
        %v974 = vunpack.c.l.b16 %v435
        %v975 = vunpack.c.h.b16 %v435
        %v976 = vunpack.c.l.b16 %v436
        %v977 = vunpack.c.h.b16 %v436
        %v978 = vunpack.c.l.b16 %v437
        %v979 = vunpack.c.h.b16 %v437
        %v980 = vunpack.c.l.b16 %v438
        %v981 = vunpack.c.h.b16 %v438
        %v982 = vunpack.c.l.b16 %v439
        %v983 = vunpack.c.h.b16 %v439
        %v984 = vunpack.c.l.b16 %v440
        %v985 = vunpack.c.h.b16 %v440
        %v986 = vunpack.c.l.b16 %v441
        %v987 = vunpack.c.h.b16 %v441
        %v988 = vunpack.c.l.b16 %v442
        %v989 = vunpack.c.h.b16 %v442
        %v990 = vunpack.c.l.b16 %v443
        %v991 = vunpack.c.h.b16 %v443
        %v992 = vunpack.c.l.b16 %v444
        %v993 = vunpack.c.h.b16 %v444
        %v994 = vunpack.c.l.b16 %v445
        %v995 = vunpack.c.h.b16 %v445
        %v996 = vunpack.c.l.b16 %v446
        %v997 = vunpack.c.h.b16 %v446
        %v998 = vunpack.c.l.b16 %v447
        %v999 = vunpack.c.h.b16 %v447
        %v1000 = vunpack.c.l.b16 %v448
        %v1001 = vunpack.c.h.b16 %v448
        %v1002 = vunpack.c.l.b16 %v449
        %v1003 = vunpack.c.h.b16 %v449
        %v1004 = vunpack.c.l.b16 %v450
        %v1005 = vunpack.c.h.b16 %v450
        %v1006 = vunpack.c.l.b16 %v451
        %v1007 = vunpack.c.h.b16 %v451
        %v1008 = vunpack.c.l.b16 %v452
        %v1009 = vunpack.c.h.b16 %v452
        %v1010 = vunpack.c.l.b16 %v453
        %v1011 = vunpack.c.h.b16 %v453
        %v1012 = vunpack.c.l.b16 %v454
        %v1013 = vunpack.c.h.b16 %v454
        %v1014 = vunpack.c.l.b16 %v455
        %v1015 = vunpack.c.h.b16 %v455
        %v1016 = vunpack.c.l.b16 %v456
        %v1017 = vunpack.c.h.b16 %v456
        %v1018 = vunpack.c.l.b16 %v457
        %v1019 = vunpack.c.h.b16 %v457
        %v1020 = vunpack.c.l.b16 %v458
        %v1021 = vunpack.c.h.b16 %v458
        %v1022 = vunpack.c.l.b16 %v459
        %v1023 = vunpack.c.h.b16 %v459
        %v1024 = vunpack.c.l.b16 %v460
        %v1025 = vunpack.c.h.b16 %v460
        %v1026 = vunpack.c.l.b16 %v461
        %v1027 = vunpack.c.h.b16 %v461
        %v1028 = vunpack.c.l.b16 %v462
        %v1029 = vunpack.c.h.b16 %v462
        %v1030 = vunpack.c.l.b16 %v463
        %v1031 = vunpack.c.h.b16 %v463
        %v1032 = vunpack.c.l.b16 %v464
        %v1033 = vunpack.c.h.b16 %v464
        %v1034 = vunpack.c.l.b16 %v465
        %v1035 = vunpack.c.h.b16 %v465
        %v1036 = vunpack.c.l.b16 %v466
        %v1037 = vunpack.c.h.b16 %v466
        %v1038 = vunpack.c.l.b16 %v467
        %v1039 = vunpack.c.h.b16 %v467
        %v1040 = vunpack.c.l.b16 %v468
        %v1041 = vunpack.c.h.b16 %v468
        %v1042 = vunpack.c.l.b16 %v469
        %v1043 = vunpack.c.h.b16 %v469
        %v1044 = vunpack.c.l.b16 %v470
        %v1045 = vunpack.c.h.b16 %v470
        %v1046 = vunpack.c.l.b16 %v471
        %v1047 = vunpack.c.h.b16 %v471
        %v1048 = vunpack.c.l.b16 %v472
        %v1049 = vunpack.c.h.b16 %v472
        %v1050 = vunpack.c.l.b16 %v473
        %v1051 = vunpack.c.h.b16 %v473
        %v1052 = vunpack.c.l.b16 %v474
        %v1053 = vunpack.c.h.b16 %v474
        %v1054 = vunpack.c.l.b16 %v475
        %v1055 = vunpack.c.h.b16 %v475
        %v1056 = vunpack.c.l.b16 %v476
        %v1057 = vunpack.c.h.b16 %v476
        %v1058 = vunpack.c.l.b16 %v477
        %v1059 = vunpack.c.h.b16 %v477
        %v1060 = vunpack.c.l.b16 %v478
        %v1061 = vunpack.c.h.b16 %v478
        %v1062 = vunpack.c.l.b16 %v479
        %v1063 = vunpack.c.h.b16 %v479
        %v1064 = vunpack.c.l.b16 %v480
        %v1065 = vunpack.c.h.b16 %v480
        %v1066 = vunpack.c.l.b16 %v481
        %v1067 = vunpack.c.h.b16 %v481
        %v1068 = vunpack.c.l.b16 %v482
        %v1069 = vunpack.c.h.b16 %v482
        %v1070 = vunpack.c.l.b16 %v483
        %v1071 = vunpack.c.h.b16 %v483
        %v1072 = vunpack.c.l.b16 %v484
        %v1073 = vunpack.c.h.b16 %v484
        %v1074 = vunpack.c.l.b16 %v485
        %v1075 = vunpack.c.h.b16 %v485
        %v1076 = vunpack.c.l.b16 %v486
        %v1077 = vunpack.c.h.b16 %v486
        %v1078 = vunpack.c.l.b16 %v487
        %v1079 = vunpack.c.h.b16 %v487
        %v1080 = vunpack.c.l.b16 %v488
        %v1081 = vunpack.c.h.b16 %v488
        %v1082 = vunpack.c.l.b16 %v489
        %v1083 = vunpack.c.h.b16 %v489
        %v1084 = vunpack.c.l.b16 %v490
        %v1085 = vunpack.c.h.b16 %v490
        %v1086 = vunpack.c.l.b16 %v491
        %v1087 = vunpack.c.h.b16 %v491
        %v1088 = vunpack.c.l.b16 %v492
        %v1089 = vunpack.c.h.b16 %v492
        %v1090 = vunpack.c.l.b16 %v493
        %v1091 = vunpack.c.h.b16 %v493
        %v1092 = vunpack.c.l.b16 %v494
        %v1093 = vunpack.c.h.b16 %v494
        %v1094 = vunpack.c.l.b16 %v495
        %v1095 = vunpack.c.h.b16 %v495
        %v1096 = vunpack.c.l.b16 %v496
        %v1097 = vunpack.c.h.b16 %v496
        %v1098 = vunpack.c.l.b16 %v497
        %v1099 = vunpack.c.h.b16 %v497
        %v1100 = vunpack.c.l.b16 %v498
        %v1101 = vunpack.c.h.b16 %v498
        %v1102 = vunpack.c.l.b16 %v499
        %v1103 = vunpack.c.h.b16 %v499
        %v1104 = vunpack.c.l.b16 %v500
        %v1105 = vunpack.c.h.b16 %v500
        %v1106 = vunpack.c.l.b16 %v501
        %v1107 = vunpack.c.h.b16 %v501
        %v1108 = vunpack.c.l.b16 %v502
        %v1109 = vunpack.c.h.b16 %v502
        %v1110 = vunpack.c.l.b16 %v503
        %v1111 = vunpack.c.h.b16 %v503
        %v1112 = vunpack.c.l.b16 %v504
        %v1113 = vunpack.c.h.b16 %v504
        %v1114 = vunpack.c.l.b16 %v505
        %v1115 = vunpack.c.h.b16 %v505
        %v1116 = vpack.c.b16 %v728, %v724
        %v1117 = vpack.c.b16 %v729, %v725
        %v1118 = vpack.c.b16 %v730, %v726
        %v1119 = vpack.c.b16 %v731, %v727
        %v1120 = vpack.c.b16 %v736, %v732
        %v1121 = vpack.c.b16 %v737, %v733
        %v1122 = vpack.c.b16 %v738, %v734
        %v1123 = vpack.c.b16 %v739, %v735
        %v1124 = vpack.c.b16 %v744, %v740
        %v1125 = vpack.c.b16 %v745, %v741
        %v1126 = vpack.c.b16 %v746, %v742
        %v1127 = vpack.c.b16 %v747, %v743
        %v1128 = vpack.c.b16 %v752, %v748
        %v1129 = vpack.c.b16 %v753, %v749
        %v1130 = vpack.c.b16 %v754, %v750
        %v1131 = vpack.c.b16 %v755, %v751
        %v1132 = vpack.c.b16 %v760, %v756
        %v1133 = vpack.c.b16 %v761, %v757
        %v1134 = vpack.c.b16 %v762, %v758
        %v1135 = vpack.c.b16 %v763, %v759
        %v1136 = vpack.c.b16 %v768, %v764
        %v1137 = vpack.c.b16 %v769, %v765
        %v1138 = vpack.c.b16 %v770, %v766
        %v1139 = vpack.c.b16 %v771, %v767
        %v1140 = vpack.c.b16 %v776, %v772
        %v1141 = vpack.c.b16 %v777, %v773
        %v1142 = vpack.c.b16 %v778, %v774
        %v1143 = vpack.c.b16 %v779, %v775
        %v1144 = vpack.c.b16 %v784, %v780
        %v1145 = vpack.c.b16 %v785, %v781
        %v1146 = vpack.c.b16 %v786, %v782
        %v1147 = vpack.c.b16 %v787, %v783
        %v1148 = vpack.c.b16 %v792, %v788
        %v1149 = vpack.c.b16 %v793, %v789
        %v1150 = vpack.c.b16 %v794, %v790
        %v1151 = vpack.c.b16 %v795, %v791
        %v1152 = vpack.c.b16 %v800, %v796
        %v1153 = vpack.c.b16 %v801, %v797
        %v1154 = vpack.c.b16 %v802, %v798
        %v1155 = vpack.c.b16 %v803, %v799
        %v1156 = vpack.c.b16 %v808, %v804
        %v1157 = vpack.c.b16 %v809, %v805
        %v1158 = vpack.c.b16 %v810, %v806
        %v1159 = vpack.c.b16 %v811, %v807
        %v1160 = vpack.c.b16 %v816, %v812
        %v1161 = vpack.c.b16 %v817, %v813
        %v1162 = vpack.c.b16 %v818, %v814
        %v1163 = vpack.c.b16 %v819, %v815
        %v1164 = vpack.c.b16 %v824, %v820
        %v1165 = vpack.c.b16 %v825, %v821
        %v1166 = vpack.c.b16 %v826, %v822
        %v1167 = vpack.c.b16 %v827, %v823
        %v1168 = vpack.c.b16 %v832, %v828
        %v1169 = vpack.c.b16 %v833, %v829
        %v1170 = vpack.c.b16 %v834, %v830
        %v1171 = vpack.c.b16 %v835, %v831
        %v1172 = vpack.c.b16 %v840, %v836
        %v1173 = vpack.c.b16 %v841, %v837
        %v1174 = vpack.c.b16 %v842, %v838
        %v1175 = vpack.c.b16 %v843, %v839
        %v1176 = vpack.c.b16 %v848, %v844
        %v1177 = vpack.c.b16 %v849, %v845
        %v1178 = vpack.c.b16 %v850, %v846
        %v1179 = vpack.c.b16 %v851, %v847
        %v1180 = vpack.c.b16 %v856, %v852
        %v1181 = vpack.c.b16 %v857, %v853
        %v1182 = vpack.c.b16 %v858, %v854
        %v1183 = vpack.c.b16 %v859, %v855
        %v1184 = vpack.c.b16 %v864, %v860
        %v1185 = vpack.c.b16 %v865, %v861
        %v1186 = vpack.c.b16 %v866, %v862
        %v1187 = vpack.c.b16 %v867, %v863
        %v1188 = vpack.c.b16 %v872, %v868
        %v1189 = vpack.c.b16 %v873, %v869
        %v1190 = vpack.c.b16 %v874, %v870
        %v1191 = vpack.c.b16 %v875, %v871
        %v1192 = vpack.c.b16 %v880, %v876
        %v1193 = vpack.c.b16 %v881, %v877
        %v1194 = vpack.c.b16 %v882, %v878
        %v1195 = vpack.c.b16 %v883, %v879
        %v1196 = vpack.c.b16 %v888, %v884
        %v1197 = vpack.c.b16 %v889, %v885
        %v1198 = vpack.c.b16 %v890, %v886
        %v1199 = vpack.c.b16 %v891, %v887
        %v1200 = vpack.c.b16 %v896, %v892
        %v1201 = vpack.c.b16 %v897, %v893
        %v1202 = vpack.c.b16 %v898, %v894
        %v1203 = vpack.c.b16 %v899, %v895
        %v1204 = vpack.c.b16 %v904, %v900
        %v1205 = vpack.c.b16 %v905, %v901
        %v1206 = vpack.c.b16 %v906, %v902
        %v1207 = vpack.c.b16 %v907, %v903
        %v1208 = vpack.c.b16 %v912, %v908
        %v1209 = vpack.c.b16 %v913, %v909
        %v1210 = vpack.c.b16 %v914, %v910
        %v1211 = vpack.c.b16 %v915, %v911
        %v1212 = vpack.c.b16 %v920, %v916
        %v1213 = vpack.c.b16 %v921, %v917
        %v1214 = vpack.c.b16 %v922, %v918
        %v1215 = vpack.c.b16 %v923, %v919
        %v1216 = vpack.c.b16 %v928, %v924
        %v1217 = vpack.c.b16 %v929, %v925
        %v1218 = vpack.c.b16 %v930, %v926
        %v1219 = vpack.c.b16 %v931, %v927
        %v1220 = vpack.c.b16 %v936, %v932
        %v1221 = vpack.c.b16 %v937, %v933
        %v1222 = vpack.c.b16 %v938, %v934
        %v1223 = vpack.c.b16 %v939, %v935
        %v1224 = vpack.c.b16 %v944, %v940
        %v1225 = vpack.c.b16 %v945, %v941
        %v1226 = vpack.c.b16 %v946, %v942
        %v1227 = vpack.c.b16 %v947, %v943
        %v1228 = vpack.c.b16 %v952, %v948
        %v1229 = vpack.c.b16 %v953, %v949
        %v1230 = vpack.c.b16 %v954, %v950
        %v1231 = vpack.c.b16 %v955, %v951
        %v1232 = vpack.c.b16 %v960, %v956
        %v1233 = vpack.c.b16 %v961, %v957
        %v1234 = vpack.c.b16 %v962, %v958
        %v1235 = vpack.c.b16 %v963, %v959
        %v1236 = vpack.c.b16 %v968, %v964
        %v1237 = vpack.c.b16 %v969, %v965
        %v1238 = vpack.c.b16 %v970, %v966
        %v1239 = vpack.c.b16 %v971, %v967
        %v1240 = vpack.c.b16 %v976, %v972
        %v1241 = vpack.c.b16 %v977, %v973
        %v1242 = vpack.c.b16 %v978, %v974
        %v1243 = vpack.c.b16 %v979, %v975
        %v1244 = vpack.c.b16 %v984, %v980
        %v1245 = vpack.c.b16 %v985, %v981
        %v1246 = vpack.c.b16 %v986, %v982
        %v1247 = vpack.c.b16 %v987, %v983
        %v1248 = vpack.c.b16 %v992, %v988
        %v1249 = vpack.c.b16 %v993, %v989
        %v1250 = vpack.c.b16 %v994, %v990
        %v1251 = vpack.c.b16 %v995, %v991
        %v1252 = vpack.c.b16 %v1000, %v996
        %v1253 = vpack.c.b16 %v1001, %v997
        %v1254 = vpack.c.b16 %v1002, %v998
        %v1255 = vpack.c.b16 %v1003, %v999
        %v1256 = vpack.c.b16 %v1008, %v1004
        %v1257 = vpack.c.b16 %v1009, %v1005
        %v1258 = vpack.c.b16 %v1010, %v1006
        %v1259 = vpack.c.b16 %v1011, %v1007
        %v1260 = vpack.c.b16 %v1016, %v1012
        %v1261 = vpack.c.b16 %v1017, %v1013
        %v1262 = vpack.c.b16 %v1018, %v1014
        %v1263 = vpack.c.b16 %v1019, %v1015
        %v1264 = vpack.c.b16 %v1024, %v1020
        %v1265 = vpack.c.b16 %v1025, %v1021
        %v1266 = vpack.c.b16 %v1026, %v1022
        %v1267 = vpack.c.b16 %v1027, %v1023
        %v1268 = vpack.c.b16 %v1032, %v1028
        %v1269 = vpack.c.b16 %v1033, %v1029
        %v1270 = vpack.c.b16 %v1034, %v1030
        %v1271 = vpack.c.b16 %v1035, %v1031
        %v1272 = vpack.c.b16 %v1040, %v1036
        %v1273 = vpack.c.b16 %v1041, %v1037
        %v1274 = vpack.c.b16 %v1042, %v1038
        %v1275 = vpack.c.b16 %v1043, %v1039
        %v1276 = vpack.c.b16 %v1048, %v1044
        %v1277 = vpack.c.b16 %v1049, %v1045
        %v1278 = vpack.c.b16 %v1050, %v1046
        %v1279 = vpack.c.b16 %v1051, %v1047
        %v1280 = vpack.c.b16 %v1056, %v1052
        %v1281 = vpack.c.b16 %v1057, %v1053
        %v1282 = vpack.c.b16 %v1058, %v1054
        %v1283 = vpack.c.b16 %v1059, %v1055
        %v1284 = vpack.c.b16 %v1064, %v1060
        %v1285 = vpack.c.b16 %v1065, %v1061
        %v1286 = vpack.c.b16 %v1066, %v1062
        %v1287 = vpack.c.b16 %v1067, %v1063
        %v1288 = vpack.c.b16 %v1072, %v1068
        %v1289 = vpack.c.b16 %v1073, %v1069
        %v1290 = vpack.c.b16 %v1074, %v1070
        %v1291 = vpack.c.b16 %v1075, %v1071
        %v1292 = vpack.c.b16 %v1080, %v1076
        %v1293 = vpack.c.b16 %v1081, %v1077
        %v1294 = vpack.c.b16 %v1082, %v1078
        %v1295 = vpack.c.b16 %v1083, %v1079
        %v1296 = vpack.c.b16 %v1088, %v1084
        %v1297 = vpack.c.b16 %v1089, %v1085
        %v1298 = vpack.c.b16 %v1090, %v1086
        %v1299 = vpack.c.b16 %v1091, %v1087
        %v1300 = vpack.c.b16 %v1096, %v1092
        %v1301 = vpack.c.b16 %v1097, %v1093
        %v1302 = vpack.c.b16 %v1098, %v1094
        %v1303 = vpack.c.b16 %v1099, %v1095
        %v1304 = vpack.c.b16 %v1104, %v1100
        %v1305 = vpack.c.b16 %v1105, %v1101
        %v1306 = vpack.c.b16 %v1106, %v1102
        %v1307 = vpack.c.b16 %v1107, %v1103
        %v1308 = vpack.c.b16 %v1112, %v1108
        %v1309 = vpack.c.b16 %v1113, %v1109
        %v1310 = vpack.c.b16 %v1114, %v1110
        %v1311 = vpack.c.b16 %v1115, %v1111
        %vm1508 = vcmask 130048
        %v1510 = vsel %vm1508, %v309, 0
        %1512 = vmatprep.subr.bf16.mxu0 %v1145
        %1513 = vmatpush1.bf16.msra.mxu0 %v1144
        %1514 = vmatprep.subr.bf16.mxu0 %v1141
        %1515 = vmatpush1.bf16.msra.mxu0 %v1140
        %1516 = vmatprep.subr.bf16.mxu0 %v1137
        %1517 = vmatpush1.bf16.msra.mxu0 %v1136
        %1518 = vmatprep.subr.bf16.mxu0 %v1133
        %1519 = vmatpush1.bf16.msra.mxu0 %v1132
        %1520 = vmatprep.subr.bf16.mxu0 %v1129
        %1521 = vmatpush1.bf16.msra.mxu0 %v1128
        %1522 = vmatprep.subr.bf16.mxu0 %v1125
        %1523 = vmatpush1.bf16.msra.mxu0 %v1124
        %1524 = vmatprep.subr.bf16.mxu0 %v1121
        %1525 = vmatpush1.bf16.msra.mxu0 %v1120
        %1526 = vmatprep.subr.bf16.mxu0 %v1117
        %1527 = vmatpush1.bf16.msra.mxu0 %v1116
        %1528 = vmatprep.subr.bf16.mxu0 %v1177
        %1529 = vmatpush2.bf16.msra.mxu0 %v1176
        %1530 = vmatprep.subr.bf16.mxu0 %v1173
        %1531 = vmatpush2.bf16.msra.mxu0 %v1172
        %1532 = vmatprep.subr.bf16.mxu0 %v1169
        %1533 = vmatpush2.bf16.msra.mxu0 %v1168
        %1534 = vmatprep.subr.bf16.mxu0 %v1165
        %1535 = vmatpush2.bf16.msra.mxu0 %v1164
        %1536 = vmatprep.subr.bf16.mxu0 %v1161
        %1537 = vmatpush2.bf16.msra.mxu0 %v1160
        %1538 = vmatprep.subr.bf16.mxu0 %v1157
        %1539 = vmatpush2.bf16.msra.mxu0 %v1156
        %1540 = vmatprep.subr.bf16.mxu0 %v1153
        %1541 = vmatpush2.bf16.msra.mxu0 %v1152
        %1542 = vmatprep.subr.bf16.mxu0 %v1149
        %1543 = vmatpush2.bf16.msra.mxu0 %v1148
        %1544 = vmatprep.mubr.bf16.mxu0 %v304
        %1545 = vmatmul.mubr.bf16.gmra.mxu0 %v303
        %v1546 = vpop.f32.mrf.mxu0
        %v1547 = vadd.f32 %v511, %v1546
        %v1548 = vpop.f32.mrf.mxu0
        %v1549 = vadd.f32 %v515, %v1548
        %v1550 = vpop.f32.mrf.mxu0
        %v1551 = vadd.f32 %v511, %v1550
        %v1552 = vpop.f32.mrf.mxu0
        %v1553 = vadd.f32 %v515, %v1552
        %1554 = vdwg.mxu0
        %1555 = vmatprep.subr.bf16.mxu0 %v1209
        %1556 = vmatpush1.bf16.msra.mxu0 %v1208
        %1557 = vmatprep.subr.bf16.mxu0 %v1205
        %1558 = vmatpush1.bf16.msra.mxu0 %v1204
        %1559 = vmatprep.subr.bf16.mxu0 %v1201
        %1560 = vmatpush1.bf16.msra.mxu0 %v1200
        %1561 = vmatprep.subr.bf16.mxu0 %v1197
        %1562 = vmatpush1.bf16.msra.mxu0 %v1196
        %1563 = vmatprep.subr.bf16.mxu0 %v1193
        %1564 = vmatpush1.bf16.msra.mxu0 %v1192
        %1565 = vmatprep.subr.bf16.mxu0 %v1189
        %1566 = vmatpush1.bf16.msra.mxu0 %v1188
        %1567 = vmatprep.subr.bf16.mxu0 %v1185
        %1568 = vmatpush1.bf16.msra.mxu0 %v1184
        %1569 = vmatprep.subr.bf16.mxu0 %v1181
        %1570 = vmatpush1.bf16.msra.mxu0 %v1180
        %1571 = vmatprep.subr.bf16.mxu0 %v1241
        %1572 = vmatpush2.bf16.msra.mxu0 %v1240
        %1573 = vmatprep.subr.bf16.mxu0 %v1237
        %1574 = vmatpush2.bf16.msra.mxu0 %v1236
        %1575 = vmatprep.subr.bf16.mxu0 %v1233
        %1576 = vmatpush2.bf16.msra.mxu0 %v1232
        %1577 = vmatprep.subr.bf16.mxu0 %v1229
        %1578 = vmatpush2.bf16.msra.mxu0 %v1228
        %1579 = vmatprep.subr.bf16.mxu0 %v1225
        %1580 = vmatpush2.bf16.msra.mxu0 %v1224
        %1581 = vmatprep.subr.bf16.mxu0 %v1221
        %1582 = vmatpush2.bf16.msra.mxu0 %v1220
        %1583 = vmatprep.subr.bf16.mxu0 %v1217
        %1584 = vmatpush2.bf16.msra.mxu0 %v1216
        %1585 = vmatprep.subr.bf16.mxu0 %v1213
        %1586 = vmatpush2.bf16.msra.mxu0 %v1212
        %1587 = vmatprep.mubr.bf16.mxu0 %v306
        %1588 = vmatmul.mubr.bf16.gmra.mxu0 %v305
        %v1589 = vpop.f32.mrf.mxu0
        %v1590 = vadd.f32 %v1547, %v1589
        %v1591 = vpop.f32.mrf.mxu0
        %v1592 = vadd.f32 %v1549, %v1591
        %v1593 = vpop.f32.mrf.mxu0
        %v1594 = vadd.f32 %v1551, %v1593
        %v1595 = vpop.f32.mrf.mxu0
        %v1596 = vadd.f32 %v1553, %v1595
        %1597 = vdwg.mxu0
        %1598 = vmatprep.subr.bf16.mxu0 %v1273
        %1599 = vmatpush1.bf16.msra.mxu0 %v1272
        %1600 = vmatprep.subr.bf16.mxu0 %v1269
        %1601 = vmatpush1.bf16.msra.mxu0 %v1268
        %1602 = vmatprep.subr.bf16.mxu0 %v1265
        %1603 = vmatpush1.bf16.msra.mxu0 %v1264
        %1604 = vmatprep.subr.bf16.mxu0 %v1261
        %1605 = vmatpush1.bf16.msra.mxu0 %v1260
        %1606 = vmatprep.subr.bf16.mxu0 %v1257
        %1607 = vmatpush1.bf16.msra.mxu0 %v1256
        %1608 = vmatprep.subr.bf16.mxu0 %v1253
        %1609 = vmatpush1.bf16.msra.mxu0 %v1252
        %1610 = vmatprep.subr.bf16.mxu0 %v1249
        %1611 = vmatpush1.bf16.msra.mxu0 %v1248
        %1612 = vmatprep.subr.bf16.mxu0 %v1245
        %1613 = vmatpush1.bf16.msra.mxu0 %v1244
        %1614 = vmatprep.subr.bf16.mxu0 %v1305
        %1615 = vmatpush2.bf16.msra.mxu0 %v1304
        %1616 = vmatprep.subr.bf16.mxu0 %v1301
        %1617 = vmatpush2.bf16.msra.mxu0 %v1300
        %1618 = vmatprep.subr.bf16.mxu0 %v1297
        %1619 = vmatpush2.bf16.msra.mxu0 %v1296
        %1620 = vmatprep.subr.bf16.mxu0 %v1293
        %1621 = vmatpush2.bf16.msra.mxu0 %v1292
        %1622 = vmatprep.subr.bf16.mxu0 %v1289
        %1623 = vmatpush2.bf16.msra.mxu0 %v1288
        %1624 = vmatprep.subr.bf16.mxu0 %v1285
        %1625 = vmatpush2.bf16.msra.mxu0 %v1284
        %1626 = vmatprep.subr.bf16.mxu0 %v1281
        %1627 = vmatpush2.bf16.msra.mxu0 %v1280
        %1628 = vmatprep.subr.bf16.mxu0 %v1277
        %1629 = vmatpush2.bf16.msra.mxu0 %v1276
        %1630 = vmatprep.mubr.bf16.mxu0 %v308
        %1631 = vmatmul.mubr.bf16.gmra.mxu0 %v307
        %v1632 = vpop.f32.mrf.mxu0
        %v1633 = vadd.f32 %v1590, %v1632
        %v1634 = vpop.f32.mrf.mxu0
        %v1635 = vadd.f32 %v1592, %v1634
        %v1636 = vpop.f32.mrf.mxu0
        %v1637 = vadd.f32 %v1594, %v1636
        %v1638 = vpop.f32.mrf.mxu0
        %v1639 = vadd.f32 %v1596, %v1638
        %1640 = vdwg.mxu0
        %1641 = vmatprep.subr.bf16.mxu0 0
        %1642 = vmatpush1.bf16.msra.mxu0 0
        %1643 = vmatprep.subr.bf16.mxu0 0
        %1644 = vmatpush1.bf16.msra.mxu0 0
        %1645 = vmatprep.subr.bf16.mxu0 0
        %1646 = vmatpush1.bf16.msra.mxu0 0
        %1647 = vmatprep.subr.bf16.mxu0 0
        %1648 = vmatpush1.bf16.msra.mxu0 0
        %1649 = vmatprep.subr.bf16.mxu0 0
        %1650 = vmatpush1.bf16.msra.mxu0 0
        %1651 = vmatprep.subr.bf16.mxu0 0
        %1652 = vmatpush1.bf16.msra.mxu0 0
        %1653 = vmatprep.subr.bf16.mxu0 0
        %1654 = vmatpush1.bf16.msra.mxu0 0
        %1655 = vmatprep.subr.bf16.mxu0 %v1309
        %1656 = vmatpush1.bf16.msra.mxu0 %v1308
        %1657 = vmatprep.subr.bf16.mxu0 0
        %1658 = vmatpush2.bf16.msra.mxu0 0
        %1659 = vmatprep.subr.bf16.mxu0 0
        %1660 = vmatpush2.bf16.msra.mxu0 0
        %1661 = vmatprep.subr.bf16.mxu0 0
        %1662 = vmatpush2.bf16.msra.mxu0 0
        %1663 = vmatprep.subr.bf16.mxu0 0
        %1664 = vmatpush2.bf16.msra.mxu0 0
        %1665 = vmatprep.subr.bf16.mxu0 0
        %1666 = vmatpush2.bf16.msra.mxu0 0
        %1667 = vmatprep.subr.bf16.mxu0 0
        %1668 = vmatpush2.bf16.msra.mxu0 0
        %1669 = vmatprep.subr.bf16.mxu0 0
        %1670 = vmatpush2.bf16.msra.mxu0 0
        %1671 = vmatprep.subr.bf16.mxu0 0
        %1672 = vmatpush2.bf16.msra.mxu0 0
        %1673 = vmatprep.mubr.bf16.mxu0 0
        %1674 = vmatmul.mubr.bf16.gmra.mxu0 %v1510
        %v1675 = vpop.f32.mrf.mxu0
        %v1676 = vadd.f32 %v1633, %v1675
        %v1677 = vpop.f32.mrf.mxu0
        %v1678 = vadd.f32 %v1635, %v1677
        %v1679 = vpop.f32.mrf.mxu0
        %v1680 = vadd.f32 %v1637, %v1679
        %v1681 = vpop.f32.mrf.mxu0
        %v1682 = vadd.f32 %v1639, %v1681
        %1683 = vdwg.mxu0
        %1684 = vmatprep.subr.bf16.mxu0 %v1147
        %1685 = vmatpush1.bf16.msra.mxu0 %v1146
        %1686 = vmatprep.subr.bf16.mxu0 %v1143
        %1687 = vmatpush1.bf16.msra.mxu0 %v1142
        %1688 = vmatprep.subr.bf16.mxu0 %v1139
        %1689 = vmatpush1.bf16.msra.mxu0 %v1138
        %1690 = vmatprep.subr.bf16.mxu0 %v1135
        %1691 = vmatpush1.bf16.msra.mxu0 %v1134
        %1692 = vmatprep.subr.bf16.mxu0 %v1131
        %1693 = vmatpush1.bf16.msra.mxu0 %v1130
        %1694 = vmatprep.subr.bf16.mxu0 %v1127
        %1695 = vmatpush1.bf16.msra.mxu0 %v1126
        %1696 = vmatprep.subr.bf16.mxu0 %v1123
        %1697 = vmatpush1.bf16.msra.mxu0 %v1122
        %1698 = vmatprep.subr.bf16.mxu0 %v1119
        %1699 = vmatpush1.bf16.msra.mxu0 %v1118
        %1700 = vmatprep.subr.bf16.mxu0 %v1179
        %1701 = vmatpush2.bf16.msra.mxu0 %v1178
        %1702 = vmatprep.subr.bf16.mxu0 %v1175
        %1703 = vmatpush2.bf16.msra.mxu0 %v1174
        %1704 = vmatprep.subr.bf16.mxu0 %v1171
        %1705 = vmatpush2.bf16.msra.mxu0 %v1170
        %1706 = vmatprep.subr.bf16.mxu0 %v1167
        %1707 = vmatpush2.bf16.msra.mxu0 %v1166
        %1708 = vmatprep.subr.bf16.mxu0 %v1163
        %1709 = vmatpush2.bf16.msra.mxu0 %v1162
        %1710 = vmatprep.subr.bf16.mxu0 %v1159
        %1711 = vmatpush2.bf16.msra.mxu0 %v1158
        %1712 = vmatprep.subr.bf16.mxu0 %v1155
        %1713 = vmatpush2.bf16.msra.mxu0 %v1154
        %1714 = vmatprep.subr.bf16.mxu0 %v1151
        %1715 = vmatpush2.bf16.msra.mxu0 %v1150
        %1716 = vmatprep.mubr.bf16.mxu0 %v304
        %1717 = vmatmul.mubr.bf16.gmra.mxu0 %v303
        %v1718 = vpop.f32.mrf.mxu0
        %v1719 = vadd.f32 %v519, %v1718
        %v1720 = vpop.f32.mrf.mxu0
        %v1721 = vadd.f32 %v523, %v1720
        %v1722 = vpop.f32.mrf.mxu0
        %v1723 = vadd.f32 %v519, %v1722
        %v1724 = vpop.f32.mrf.mxu0
        %v1725 = vadd.f32 %v523, %v1724
        %1726 = vdwg.mxu0
        %1727 = vmatprep.subr.bf16.mxu0 %v1211
        %1728 = vmatpush1.bf16.msra.mxu0 %v1210
        %1729 = vmatprep.subr.bf16.mxu0 %v1207
        %1730 = vmatpush1.bf16.msra.mxu0 %v1206
        %1731 = vmatprep.subr.bf16.mxu0 %v1203
        %1732 = vmatpush1.bf16.msra.mxu0 %v1202
        %1733 = vmatprep.subr.bf16.mxu0 %v1199
        %1734 = vmatpush1.bf16.msra.mxu0 %v1198
        %1735 = vmatprep.subr.bf16.mxu0 %v1195
        %1736 = vmatpush1.bf16.msra.mxu0 %v1194
        %1737 = vmatprep.subr.bf16.mxu0 %v1191
        %1738 = vmatpush1.bf16.msra.mxu0 %v1190
        %1739 = vmatprep.subr.bf16.mxu0 %v1187
        %1740 = vmatpush1.bf16.msra.mxu0 %v1186
        %1741 = vmatprep.subr.bf16.mxu0 %v1183
        %1742 = vmatpush1.bf16.msra.mxu0 %v1182
        %1743 = vmatprep.subr.bf16.mxu0 %v1243
        %1744 = vmatpush2.bf16.msra.mxu0 %v1242
        %1745 = vmatprep.subr.bf16.mxu0 %v1239
        %1746 = vmatpush2.bf16.msra.mxu0 %v1238
        %1747 = vmatprep.subr.bf16.mxu0 %v1235
        %1748 = vmatpush2.bf16.msra.mxu0 %v1234
        %1749 = vmatprep.subr.bf16.mxu0 %v1231
        %1750 = vmatpush2.bf16.msra.mxu0 %v1230
        %1751 = vmatprep.subr.bf16.mxu0 %v1227
        %1752 = vmatpush2.bf16.msra.mxu0 %v1226
        %1753 = vmatprep.subr.bf16.mxu0 %v1223
        %1754 = vmatpush2.bf16.msra.mxu0 %v1222
        %1755 = vmatprep.subr.bf16.mxu0 %v1219
        %1756 = vmatpush2.bf16.msra.mxu0 %v1218
        %1757 = vmatprep.subr.bf16.mxu0 %v1215
        %1758 = vmatpush2.bf16.msra.mxu0 %v1214
        %1759 = vmatprep.mubr.bf16.mxu0 %v306
        %1760 = vmatmul.mubr.bf16.gmra.mxu0 %v305
        %v1761 = vpop.f32.mrf.mxu0
        %v1762 = vadd.f32 %v1719, %v1761
        %v1763 = vpop.f32.mrf.mxu0
        %v1764 = vadd.f32 %v1721, %v1763
        %v1765 = vpop.f32.mrf.mxu0
        %v1766 = vadd.f32 %v1723, %v1765
        %v1767 = vpop.f32.mrf.mxu0
        %v1768 = vadd.f32 %v1725, %v1767
        %1769 = vdwg.mxu0
        %1770 = vmatprep.subr.bf16.mxu0 %v1275
        %1771 = vmatpush1.bf16.msra.mxu0 %v1274
        %1772 = vmatprep.subr.bf16.mxu0 %v1271
        %1773 = vmatpush1.bf16.msra.mxu0 %v1270
        %1774 = vmatprep.subr.bf16.mxu0 %v1267
        %1775 = vmatpush1.bf16.msra.mxu0 %v1266
        %1776 = vmatprep.subr.bf16.mxu0 %v1263
        %1777 = vmatpush1.bf16.msra.mxu0 %v1262
        %1778 = vmatprep.subr.bf16.mxu0 %v1259
        %1779 = vmatpush1.bf16.msra.mxu0 %v1258
        %1780 = vmatprep.subr.bf16.mxu0 %v1255
        %1781 = vmatpush1.bf16.msra.mxu0 %v1254
        %1782 = vmatprep.subr.bf16.mxu0 %v1251
        %1783 = vmatpush1.bf16.msra.mxu0 %v1250
        %1784 = vmatprep.subr.bf16.mxu0 %v1247
        %1785 = vmatpush1.bf16.msra.mxu0 %v1246
        %1786 = vmatprep.subr.bf16.mxu0 %v1307
        %1787 = vmatpush2.bf16.msra.mxu0 %v1306
        %1788 = vmatprep.subr.bf16.mxu0 %v1303
        %1789 = vmatpush2.bf16.msra.mxu0 %v1302
        %1790 = vmatprep.subr.bf16.mxu0 %v1299
        %1791 = vmatpush2.bf16.msra.mxu0 %v1298
        %1792 = vmatprep.subr.bf16.mxu0 %v1295
        %1793 = vmatpush2.bf16.msra.mxu0 %v1294
        %1794 = vmatprep.subr.bf16.mxu0 %v1291
        %1795 = vmatpush2.bf16.msra.mxu0 %v1290
        %1796 = vmatprep.subr.bf16.mxu0 %v1287
        %1797 = vmatpush2.bf16.msra.mxu0 %v1286
        %1798 = vmatprep.subr.bf16.mxu0 %v1283
        %1799 = vmatpush2.bf16.msra.mxu0 %v1282
        %1800 = vmatprep.subr.bf16.mxu0 %v1279
        %1801 = vmatpush2.bf16.msra.mxu0 %v1278
        %1802 = vmatprep.mubr.bf16.mxu0 %v308
        %1803 = vmatmul.mubr.bf16.gmra.mxu0 %v307
        %v1804 = vpop.f32.mrf.mxu0
        %v1805 = vadd.f32 %v1762, %v1804
        %v1806 = vpop.f32.mrf.mxu0
        %v1807 = vadd.f32 %v1764, %v1806
        %v1808 = vpop.f32.mrf.mxu0
        %v1809 = vadd.f32 %v1766, %v1808
        %v1810 = vpop.f32.mrf.mxu0
        %v1811 = vadd.f32 %v1768, %v1810
        %1812 = vdwg.mxu0
        %1813 = vmatprep.subr.bf16.mxu0 0
        %1814 = vmatpush1.bf16.msra.mxu0 0
        %1815 = vmatprep.subr.bf16.mxu0 0
        %1816 = vmatpush1.bf16.msra.mxu0 0
        %1817 = vmatprep.subr.bf16.mxu0 0
        %1818 = vmatpush1.bf16.msra.mxu0 0
        %1819 = vmatprep.subr.bf16.mxu0 0
        %1820 = vmatpush1.bf16.msra.mxu0 0
        %1821 = vmatprep.subr.bf16.mxu0 0
        %1822 = vmatpush1.bf16.msra.mxu0 0
        %1823 = vmatprep.subr.bf16.mxu0 0
        %1824 = vmatpush1.bf16.msra.mxu0 0
        %1825 = vmatprep.subr.bf16.mxu0 0
        %1826 = vmatpush1.bf16.msra.mxu0 0
        %1827 = vmatprep.subr.bf16.mxu0 %v1311
        %1828 = vmatpush1.bf16.msra.mxu0 %v1310
        %1829 = vmatprep.subr.bf16.mxu0 0
        %1830 = vmatpush2.bf16.msra.mxu0 0
        %1831 = vmatprep.subr.bf16.mxu0 0
        %1832 = vmatpush2.bf16.msra.mxu0 0
        %1833 = vmatprep.subr.bf16.mxu0 0
        %1834 = vmatpush2.bf16.msra.mxu0 0
        %1835 = vmatprep.subr.bf16.mxu0 0
        %1836 = vmatpush2.bf16.msra.mxu0 0
        %1837 = vmatprep.subr.bf16.mxu0 0
        %1838 = vmatpush2.bf16.msra.mxu0 0
        %1839 = vmatprep.subr.bf16.mxu0 0
        %1840 = vmatpush2.bf16.msra.mxu0 0
        %1841 = vmatprep.subr.bf16.mxu0 0
        %1842 = vmatpush2.bf16.msra.mxu0 0
        %1843 = vmatprep.subr.bf16.mxu0 0
        %1844 = vmatpush2.bf16.msra.mxu0 0
        %1845 = vmatprep.mubr.bf16.mxu0 0
        %1846 = vmatmul.mubr.bf16.gmra.mxu0 %v1510
        %v1847 = vpop.f32.mrf.mxu0
        %v1848 = vadd.f32 %v1805, %v1847
        %v1849 = vpop.f32.mrf.mxu0
        %v1850 = vadd.f32 %v1807, %v1849
        %v1851 = vpop.f32.mrf.mxu0
        %v1852 = vadd.f32 %v1809, %v1851
        %v1853 = vpop.f32.mrf.mxu0
        %v1854 = vadd.f32 %v1811, %v1853
        %1855 = vdwg.mxu0
        %v1856 = vmax.f32 %v1676, 0.0
        %v1857 = vmax.f32 %v1678, 0.0
        %v1858 = vmax.f32 %v1848, 0.0
        %v1859 = vmax.f32 %v1850, 0.0
        %v1860 = vmax.f32 %v1680, 0.0
        %v1861 = vmax.f32 %v1682, 0.0
        %v1862 = vmax.f32 %v1852, 0.0
        %v1863 = vmax.f32 %v1854, 0.0
        %v1864 = vpack.c.bf16 %v1860, %v1856
        %v1865 = vpack.c.bf16 %v1861, %v1857
        %v1866 = vpack.c.bf16 %v1862, %v1858
        %v1867 = vpack.c.bf16 %v1863, %v1859
        %v1868 = vld [vmem:[#allocation8] sm:$0xf]
        %v1869 = vld [vmem:[#allocation8 + $0x4] sm:$0xf]
        %v1870 = vld [vmem:[#allocation8 + $0x8] sm:$0xf]
        %v1871 = vld [vmem:[#allocation8 + $0xc] sm:$0xf]
        %v1872 = vld [vmem:[#allocation8 + $0x10] sm:$0xf]
        %v1873 = vld [vmem:[#allocation8 + $0x14] sm:$0xf]
        %v1874 = vld [vmem:[#allocation8 + $0x18] sm:$0xf]
        %v1875 = vld [vmem:[#allocation8 + $0x1c] sm:$0xf]
        %v1876 = vld [vmem:[#allocation8 + $0x20] sm:$0xf]
        %v1877 = vld [vmem:[#allocation8 + $0x24] sm:$0xf]
        %v1878 = vld [vmem:[#allocation8 + $0x28] sm:$0xf]
        %v1879 = vld [vmem:[#allocation8 + $0x2c] sm:$0xf]
        %v1880 = vld [vmem:[#allocation8 + $0x30] sm:$0xf]
        %v1881 = vld [vmem:[#allocation8 + $0x34] sm:$0xf]
        %v1882 = vld [vmem:[#allocation8 + $0x38] sm:$0xf]
        %v1883 = vld [vmem:[#allocation8 + $0x3c] sm:$0xf]
        %v1884 = vld [vmem:[#allocation8 + $0x40] sm:$0xf]
        %v1885 = vld [vmem:[#allocation8 + $0x44] sm:$0xf]
        %v1886 = vld [vmem:[#allocation8 + $0x48] sm:$0xf]
        %v1887 = vld [vmem:[#allocation8 + $0x4c] sm:$0xf]
        %v1888 = vld [vmem:[#allocation8 + $0x50] sm:$0xf]
        %v1889 = vld [vmem:[#allocation8 + $0x54] sm:$0xf]
        %v1890 = vld [vmem:[#allocation8 + $0x58] sm:$0xf]
        %v1891 = vld [vmem:[#allocation8 + $0x5c] sm:$0xf]
        %v1892 = vld [vmem:[#allocation8 + $0x60] sm:$0xf]
        %v1893 = vld [vmem:[#allocation8 + $0x64] sm:$0xf]
        %v1894 = vld [vmem:[#allocation8 + $0x68] sm:$0xf]
        %v1895 = vld [vmem:[#allocation8 + $0x6c] sm:$0xf]
        %v1896 = vld [vmem:[#allocation8 + $0x70] sm:$0xf]
        %v1897 = vld [vmem:[#allocation8 + $0x74] sm:$0xf]
        %v1898 = vld [vmem:[#allocation8 + $0x78] sm:$0xf]
        %v1899 = vld [vmem:[#allocation8 + $0x7c] sm:$0xf]
        %v1900 = vld [vmem:[#allocation8 + $0x80] sm:$0xf]
        %v1901 = vld [vmem:[#allocation8 + $0x84] sm:$0xf]
        %v1902 = vld [vmem:[#allocation8 + $0x88] sm:$0xf]
        %v1903 = vld [vmem:[#allocation8 + $0x8c] sm:$0xf]
        %v1904 = vld [vmem:[#allocation8 + $0x90] sm:$0xf]
        %v1905 = vld [vmem:[#allocation8 + $0x94] sm:$0xf]
        %v1906 = vld [vmem:[#allocation8 + $0x98] sm:$0xf]
        %v1907 = vld [vmem:[#allocation8 + $0x9c] sm:$0xf]
        %v1908 = vld [vmem:[#allocation8 + $0xa0] sm:$0xf]
        %v1909 = vld [vmem:[#allocation8 + $0xa4] sm:$0xf]
        %v1910 = vld [vmem:[#allocation8 + $0xa8] sm:$0xf]
        %v1911 = vld [vmem:[#allocation8 + $0xac] sm:$0xf]
        %v1912 = vld [vmem:[#allocation8 + $0xb0] sm:$0xf]
        %v1913 = vld [vmem:[#allocation8 + $0xb4] sm:$0xf]
        %v1914 = vld [vmem:[#allocation8 + $0xb8] sm:$0xf]
        %v1915 = vld [vmem:[#allocation8 + $0xbc] sm:$0xf]
        %v1916 = vld [vmem:[#allocation8 + $0xc0] sm:$0xf]
        %v1917 = vld [vmem:[#allocation8 + $0xc4] sm:$0xf]
        %v1918 = vld [vmem:[#allocation8 + $0xc8] sm:$0xf]
        %v1919 = vld [vmem:[#allocation8 + $0xcc] sm:$0xf]
        %v1920 = vld [vmem:[#allocation8 + $0xd0] sm:$0xf]
        %v1921 = vld [vmem:[#allocation8 + $0xd4] sm:$0xf]
        %v1922 = vld [vmem:[#allocation8 + $0xd8] sm:$0xf]
        %v1923 = vld [vmem:[#allocation8 + $0xdc] sm:$0xf]
        %v1924 = vld [vmem:[#allocation8 + $0xe0] sm:$0xf]
        %v1925 = vld [vmem:[#allocation8 + $0xe4] sm:$0xf]
        %v1926 = vld [vmem:[#allocation8 + $0xe8] sm:$0xf]
        %v1927 = vld [vmem:[#allocation8 + $0xec] sm:$0xf]
        %v1928 = vld [vmem:[#allocation8 + $0xf0] sm:$0xf]
        %v1929 = vld [vmem:[#allocation8 + $0xf4] sm:$0xf]
        %v1930 = vld [vmem:[#allocation8 + $0xf8] sm:$0xf]
        %v1931 = vld [vmem:[#allocation8 + $0xfc] sm:$0xf]
        %v1932 = vld [vmem:[%s4] sm:$0x1]
        %v1934 = vlaneseq
        %v1935 = vshrl.u32 %v1934, 7
        %v1936 = vsub.s32 0, %v1935
        %v1937 = vrot.slane %v1932, %v1936
        %v2003 = vunpack.c.l.b16 %v1868
        %v2004 = vunpack.c.l.b16 %v1869
        %v2005 = vunpack.c.l.b16 %v1870
        %v2006 = vunpack.c.l.b16 %v1871
        %v2007 = vunpack.c.l.b16 %v1872
        %v2008 = vunpack.c.l.b16 %v1873
        %v2009 = vunpack.c.l.b16 %v1874
        %v2010 = vunpack.c.l.b16 %v1875
        %v2011 = vunpack.c.l.b16 %v1876
        %v2012 = vunpack.c.l.b16 %v1877
        %v2013 = vunpack.c.l.b16 %v1878
        %v2014 = vunpack.c.l.b16 %v1879
        %v2015 = vunpack.c.l.b16 %v1880
        %v2016 = vunpack.c.l.b16 %v1881
        %v2017 = vunpack.c.l.b16 %v1882
        %v2018 = vunpack.c.l.b16 %v1883
        %v2019 = vunpack.c.l.b16 %v1884
        %v2020 = vunpack.c.l.b16 %v1885
        %v2021 = vunpack.c.l.b16 %v1886
        %v2022 = vunpack.c.l.b16 %v1887
        %v2023 = vunpack.c.l.b16 %v1888
        %v2024 = vunpack.c.l.b16 %v1889
        %v2025 = vunpack.c.l.b16 %v1890
        %v2026 = vunpack.c.l.b16 %v1891
        %v2027 = vunpack.c.l.b16 %v1892
        %v2028 = vunpack.c.l.b16 %v1893
        %v2029 = vunpack.c.l.b16 %v1894
        %v2030 = vunpack.c.l.b16 %v1895
        %v2031 = vunpack.c.l.b16 %v1896
        %v2032 = vunpack.c.l.b16 %v1897
        %v2033 = vunpack.c.l.b16 %v1898
        %v2034 = vunpack.c.l.b16 %v1899
        %v2035 = vunpack.c.l.b16 %v1900
        %v2036 = vunpack.c.l.b16 %v1901
        %v2037 = vunpack.c.l.b16 %v1902
        %v2038 = vunpack.c.l.b16 %v1903
        %v2039 = vunpack.c.l.b16 %v1904
        %v2040 = vunpack.c.l.b16 %v1905
        %v2041 = vunpack.c.l.b16 %v1906
        %v2042 = vunpack.c.l.b16 %v1907
        %v2043 = vunpack.c.l.b16 %v1908
        %v2044 = vunpack.c.l.b16 %v1909
        %v2045 = vunpack.c.l.b16 %v1910
        %v2046 = vunpack.c.l.b16 %v1911
        %v2047 = vunpack.c.l.b16 %v1912
        %v2048 = vunpack.c.l.b16 %v1913
        %v2049 = vunpack.c.l.b16 %v1914
        %v2050 = vunpack.c.l.b16 %v1915
        %v2051 = vunpack.c.l.b16 %v1916
        %v2052 = vunpack.c.l.b16 %v1917
        %v2053 = vunpack.c.l.b16 %v1918
        %v2054 = vunpack.c.l.b16 %v1919
        %v2055 = vunpack.c.l.b16 %v1920
        %v2056 = vunpack.c.l.b16 %v1921
        %v2057 = vunpack.c.l.b16 %v1922
        %v2058 = vunpack.c.l.b16 %v1923
        %v2059 = vunpack.c.l.b16 %v1924
        %v2060 = vunpack.c.l.b16 %v1925
        %v2061 = vunpack.c.l.b16 %v1926
        %v2062 = vunpack.c.l.b16 %v1927
        %v2063 = vunpack.c.l.b16 %v1928
        %v2064 = vunpack.c.l.b16 %v1929
        %v2065 = vunpack.c.l.b16 %v1930
        %v2066 = vunpack.c.l.b16 %v1931
        %v2067 = vpack.c.b16 %v2004, %v2003
        %v2068 = vpack.c.b16 %v2006, %v2005
        %v2069 = vpack.c.b16 %v2008, %v2007
        %v2070 = vpack.c.b16 %v2010, %v2009
        %v2071 = vpack.c.b16 %v2012, %v2011
        %v2072 = vpack.c.b16 %v2014, %v2013
        %v2073 = vpack.c.b16 %v2016, %v2015
        %v2074 = vpack.c.b16 %v2018, %v2017
        %v2075 = vpack.c.b16 %v2020, %v2019
        %v2076 = vpack.c.b16 %v2022, %v2021
        %v2077 = vpack.c.b16 %v2024, %v2023
        %v2078 = vpack.c.b16 %v2026, %v2025
        %v2079 = vpack.c.b16 %v2028, %v2027
        %v2080 = vpack.c.b16 %v2030, %v2029
        %v2081 = vpack.c.b16 %v2032, %v2031
        %v2082 = vpack.c.b16 %v2034, %v2033
        %v2083 = vpack.c.b16 %v2036, %v2035
        %v2084 = vpack.c.b16 %v2038, %v2037
        %v2085 = vpack.c.b16 %v2040, %v2039
        %v2086 = vpack.c.b16 %v2042, %v2041
        %v2087 = vpack.c.b16 %v2044, %v2043
        %v2088 = vpack.c.b16 %v2046, %v2045
        %v2089 = vpack.c.b16 %v2048, %v2047
        %v2090 = vpack.c.b16 %v2050, %v2049
        %v2091 = vpack.c.b16 %v2052, %v2051
        %v2092 = vpack.c.b16 %v2054, %v2053
        %v2093 = vpack.c.b16 %v2056, %v2055
        %v2094 = vpack.c.b16 %v2058, %v2057
        %v2095 = vpack.c.b16 %v2060, %v2059
        %v2096 = vpack.c.b16 %v2062, %v2061
        %v2097 = vpack.c.b16 %v2064, %v2063
        %v2098 = vpack.c.b16 %v2066, %v2065
        %2131 = vmatprep.subr.bf16.mxu0 0
        %2132 = vmatpush1.bf16.msra.mxu0 %v2074
        %2133 = vmatprep.subr.bf16.mxu0 0
        %2134 = vmatpush1.bf16.msra.mxu0 %v2073
        %2135 = vmatprep.subr.bf16.mxu0 0
        %2136 = vmatpush1.bf16.msra.mxu0 %v2072
        %2137 = vmatprep.subr.bf16.mxu0 0
        %2138 = vmatpush1.bf16.msra.mxu0 %v2071
        %2139 = vmatprep.subr.bf16.mxu0 0
        %2140 = vmatpush1.bf16.msra.mxu0 %v2070
        %2141 = vmatprep.subr.bf16.mxu0 0
        %2142 = vmatpush1.bf16.msra.mxu0 %v2069
        %2143 = vmatprep.subr.bf16.mxu0 0
        %2144 = vmatpush1.bf16.msra.mxu0 %v2068
        %2145 = vmatprep.subr.bf16.mxu0 0
        %2146 = vmatpush1.bf16.msra.mxu0 %v2067
        %2147 = vmatprep.subr.bf16.mxu0 0
        %2148 = vmatpush2.bf16.msra.mxu0 %v2082
        %2149 = vmatprep.subr.bf16.mxu0 0
        %2150 = vmatpush2.bf16.msra.mxu0 %v2081
        %2151 = vmatprep.subr.bf16.mxu0 0
        %2152 = vmatpush2.bf16.msra.mxu0 %v2080
        %2153 = vmatprep.subr.bf16.mxu0 0
        %2154 = vmatpush2.bf16.msra.mxu0 %v2079
        %2155 = vmatprep.subr.bf16.mxu0 0
        %2156 = vmatpush2.bf16.msra.mxu0 %v2078
        %2157 = vmatprep.subr.bf16.mxu0 0
        %2158 = vmatpush2.bf16.msra.mxu0 %v2077
        %2159 = vmatprep.subr.bf16.mxu0 0
        %2160 = vmatpush2.bf16.msra.mxu0 %v2076
        %2161 = vmatprep.subr.bf16.mxu0 0
        %2162 = vmatpush2.bf16.msra.mxu0 %v2075
        %2163 = vmatprep.mubr.bf16.mxu0 %v1865
        %2164 = vmatmul.mubr.bf16.gmra.mxu0 %v1864
        %v2165 = vpop.f32.mrf.mxu0
        %v2166 = vadd.f32 %v1937, %v2165
        %v2167 = vpop.f32.mrf.mxu0
        %v2168 = vpop.f32.mrf.mxu0
        %v2169 = vadd.f32 %v1937, %v2168
        %v2170 = vpop.f32.mrf.mxu0
        %2171 = vdwg.mxu0
        %2172 = vmatprep.subr.bf16.mxu0 0
        %2173 = vmatpush1.bf16.msra.mxu0 %v2090
        %2174 = vmatprep.subr.bf16.mxu0 0
        %2175 = vmatpush1.bf16.msra.mxu0 %v2089
        %2176 = vmatprep.subr.bf16.mxu0 0
        %2177 = vmatpush1.bf16.msra.mxu0 %v2088
        %2178 = vmatprep.subr.bf16.mxu0 0
        %2179 = vmatpush1.bf16.msra.mxu0 %v2087
        %2180 = vmatprep.subr.bf16.mxu0 0
        %2181 = vmatpush1.bf16.msra.mxu0 %v2086
        %2182 = vmatprep.subr.bf16.mxu0 0
        %2183 = vmatpush1.bf16.msra.mxu0 %v2085
        %2184 = vmatprep.subr.bf16.mxu0 0
        %2185 = vmatpush1.bf16.msra.mxu0 %v2084
        %2186 = vmatprep.subr.bf16.mxu0 0
        %2187 = vmatpush1.bf16.msra.mxu0 %v2083
        %2188 = vmatprep.subr.bf16.mxu0 0
        %2189 = vmatpush2.bf16.msra.mxu0 %v2098
        %2190 = vmatprep.subr.bf16.mxu0 0
        %2191 = vmatpush2.bf16.msra.mxu0 %v2097
        %2192 = vmatprep.subr.bf16.mxu0 0
        %2193 = vmatpush2.bf16.msra.mxu0 %v2096
        %2194 = vmatprep.subr.bf16.mxu0 0
        %2195 = vmatpush2.bf16.msra.mxu0 %v2095
        %2196 = vmatprep.subr.bf16.mxu0 0
        %2197 = vmatpush2.bf16.msra.mxu0 %v2094
        %2198 = vmatprep.subr.bf16.mxu0 0
        %2199 = vmatpush2.bf16.msra.mxu0 %v2093
        %2200 = vmatprep.subr.bf16.mxu0 0
        %2201 = vmatpush2.bf16.msra.mxu0 %v2092
        %2202 = vmatprep.subr.bf16.mxu0 0
        %2203 = vmatpush2.bf16.msra.mxu0 %v2091
        %2204 = vmatprep.mubr.bf16.mxu0 %v1867
        %2205 = vmatmul.mubr.bf16.gmra.mxu0 %v1866
        %v2206 = vpop.f32.mrf.mxu0
        %v2207 = vadd.f32 %v2166, %v2206
        %v2208 = vpop.f32.mrf.mxu0
        %v2209 = vpop.f32.mrf.mxu0
        %v2210 = vadd.f32 %v2169, %v2209
        %v2211 = vpop.f32.mrf.mxu0
        %2212 = vdwg.mxu0
        %v2213 = vpack.c.bf16 %v2210, %v2207
        %v2215 = vunpack.c.l.b16 %v2213
        %v2216 = vunpack.c.h.b16 %v2213
        %v2217 = vpack.c.b16 %v2215, %v2215
        %v2218 = vpack.c.b16 %v2216, %v2216
        %2221 = vst [vmem:[%s285] sm:$0xf] %v2217
        %2222 = vst [vmem:[%s285 + $0x4] sm:$0xf] %v2218
        %s2223 = sand.u32 %s142, 1
        %s2224 = scalar_lea.sflag [#allocation4], %s2223
        %s2225 = sand.u32 %s142, 1
        %s2226 = smul.addr %s2225, 8
        %s2227 = scalar_lea.vmem [#allocation10], %s2226
        // Predicated region
        $region57: #{tpu_custom_call.1} parent=39 // pred_check
          %p2228 = pneg %p152
        $region58: #{tpu_custom_call.1} parent=39 // pred_check_branch
          %2230 = sbr.rel (%p2228) target = $region60
        $region59: #{tpu_custom_call.1} parent=39 // pred_region
          %s2231 = smul.u32 2, %s24
          %s2233 = ssub.s32 128, 128
          %2234 = vsyncadd %s2224, %s2233
          %s2235 = smul.addr %s2231, 64
          %s2236 = scalar_lea.hbm %s5, %s2235
          %s2237 = sshll.u32 %s2227, 4
          %s2238 = int_to_ptr.vmem [resolvable:$true] %s2237
          %2243 = dma.vmem_to_hbm [thread:$0]  %s2238, 128, %s2236, %s2224, 64, 64, 4
        $region60: #{tpu_custom_call.1} parent=39 // pred_fallthru
          _
      $region40: #{tpu_custom_call.1} parent=5 // pred_fallthru
        _
      %p2244 = scmp.le.s32.totalorder 2, %s19
      // Predicated region
      $region61: #{tpu_custom_call.1} parent=5 // pred_check
        %p2245 = pneg %p2244
      $region62: #{tpu_custom_call.1} parent=5 // pred_check_branch
        %2247 = sbr.rel (%p2245) target = $region64
      $region63: #{tpu_custom_call.1} parent=5 // pred_region
        %s2248 = ssub.s32 %s19, 2
        // Predicated region
        $region65: #{tpu_custom_call.1} parent=63 // pred_check
          %p2249 = pneg %p158
        $region66: #{tpu_custom_call.1} parent=63 // pred_check_branch
          %2251 = sbr.rel (%p2249) target = $region68
        $region67: #{tpu_custom_call.1} parent=63 // pred_region
          %s2252 = sand.u32 %s143, 1
          %s2253 = scalar_lea.sflag [#allocation4], %s2252
          %s2254 = sand.u32 %s143, 1
          %s2255 = smul.addr %s2254, 8
          %s2256 = scalar_lea.vmem [#allocation10], %s2255
          %2257 = dma.done %s2253, 128
        $region68: #{tpu_custom_call.1} parent=63 // pred_fallthru
          _
      $region64: #{tpu_custom_call.1} parent=5 // pred_fallthru
        _
    $region6: #{tpu_custom_call.1} parent=1 // loop_footer
      %s23 = sadd.s32 1, %s19
    $region7: #{tpu_custom_call.1} parent=1 // loop_footer_branch
      %18 = sbr.rel target = $region3
    $region8: #{tpu_custom_call.1} parent=1 // loop_exit
      _
    %2258 = vsyncpa [#allocation3], 1
    %s2259 = scalar_lea.sflag [#allocation3], 1
    %2260 = vsyncpa %s2259, 1
    %2261 = vsyncpa [#allocation6], 1
    %2262 = vsyncpa [#allocation9], 1
    %2263 = vsyncpa [#allocation4], 1
    %s2264 = scalar_lea.sflag [#allocation4], 1
    %2265 = vsyncpa %s2264, 1

</llo_original>
